<compile_context>
chip_gen: v7x
topology: tpu7x:2x2x1
jax: 0.10.0
libtpu: 0.0.40
codegen_flags: <defaults>
</compile_context>

<pallas_src>
import math
import functools

import jax
import jax.numpy as jnp
from jax import lax
from jax.experimental import pallas as pl
from jax.experimental.pallas import tpu as pltpu

PI = 3.141592  # same constant as the PyTorch module (not math.pi)


def _round_up(n, m):
    return ((n + m - 1) // m) * m


def spherize_kernel(scal_ref, x_ref, o_ref, *, quarter: bool):
    # scal_ref (SMEM, f32[5]): [scaling, radius, phi_L, eps, ang_scale]
    scaling   = scal_ref[0]
    radius    = scal_ref[1]
    phi_L     = scal_ref[2]
    eps       = scal_ref[3]
    ang_scale = scal_ref[4]

    tb, D = x_ref.shape                      # block rows, true feature width (lanes)
    x = x_ref[...]                           # (TB, D)

    # ---- angularize ('quarter' default; ang_scale carries the angle_type) ----
    sig = 1.0 / (1.0 + jnp.exp(-(scaling * x)))          # sigmoid (EUP exp + div)
    ang = ang_scale * sig + phi_L                        # (TB, D), in (0, PI)
    sin_a = jnp.sin(ang)
    cos_a = jnp.cos(ang)
    log_sin = jnp.log(sin_a + eps)                       # sin(ang) > 0: |.| dropped

    # ---- exclusive prefix sum of log_sin replaces the W_phi matmul ----------
    # Hillis-Steele inclusive scan: ceil(log2(D)) passes of roll (XLU) + add.
    lane = lax.broadcasted_iota(jnp.int32, (tb, D), 1)
    incl = log_sin
    shift = 1
    while shift < D:
        rolled = pltpu.roll(incl, shift=shift, axis=1)   # rolled[j] = incl[j-shift]
        incl = incl + jnp.where(lane >= shift, rolled, 0.0)
        shift *= 2
    # exclusive scan: excl[j] = incl[j-1] for j>0, 0 for j==0
    excl = jnp.where(lane == 0, 0.0, pltpu.roll(incl, shift=1, axis=1))

    # ---- columns 0 .. D-1 ----------------------------------------------------
    # y_j = sign(cos ang_j) * radius * exp(excl_j) * (|cos ang_j| + eps)
    if quarter:
        cos_term = cos_a + eps                           # ang < PI/2 => cos > 0, sign = +1
    else:
        cos_term = jnp.where(cos_a < 0.0, cos_a - eps, cos_a + eps)  # sign*(|cos|+eps)
    main = (radius * jnp.exp(excl)) * cos_term           # (TB, D)
    # When D % 128 == 0 this is a lane-aligned, unmasked store.
    o_ref[:, :D] = main.astype(o_ref.dtype)

    # ---- column D (and the discarded lane-padding columns D+1 .. Npad-1) ----
    # theta_D = ang_{D-1}, b_phi[D] = -PI/2  =>  y_D = radius * exp(inclusive total)
    tail = radius * jnp.exp(incl[:, D - 1:D])            # (TB, 1), sign forced +1
    npad = o_ref.shape[1]
    o_ref[:, D:] = jnp.broadcast_to(tail, (tb, npad - D)).astype(o_ref.dtype)


def make_spherization_params(num_features, *, radius=1.0, scaling=1.0,
                             delta=1e-6, eps=1e-6, lowerbound=True,
                             angle_type="quarter"):
    """Deterministic buffer construction mirroring Spherization.__init__.

    W_theta / W_phi / b_phi are only needed by the pure-JAX reference; the
    Pallas kernel uses just the 5 scalars (their structure is exploited
    analytically)."""
    D = num_features
    if lowerbound:
        L = 0.01
        upper_bound = PI / 2.0 * (1.0 - L)
        phi_L = math.asin(delta ** (1.0 / D))
        phi_L = phi_L if phi_L < upper_bound else upper_bound
    else:
        phi_L = 0.0

    eye = jnp.eye(D, dtype=jnp.float32)
    W_theta = jnp.concatenate([eye, eye[-1:]], axis=0)                 # (D+1, D)
    W_phi = jnp.triu(jnp.ones((D + 1, D + 1), jnp.float32), k=1)       # strictly upper
    W_phi = W_phi.at[-2, -1].set(0.0)
    b_phi = jnp.zeros((D + 1,), jnp.float32).at[-1].set(-PI / 2.0)

    ang_scale = (PI - 2.0 * phi_L) if angle_type == "half" else (PI / 2.0 - phi_L)
    scalars = jnp.array([scaling, radius, phi_L, eps, ang_scale], jnp.float32)
    return W_theta, W_phi, b_phi, scalars


def _choose_tb(batch, d, npad, tb_max=256, tile_budget_bytes=16 * 1024 * 1024):
    """Largest power-of-two batch tile in [8, tb_max] that does not exceed the
    batch and keeps the double-buffered f32 in/out tiles within the budget
    (headroom left for in-kernel temporaries; safe on v7x's 64 MiB VMEM)."""
    per_row = 2 * (d + npad) * 4          # double-buffered input + output rows
    tb = 8
    while tb * 2 <= min(tb_max, batch) and (tb * 2) * per_row <= tile_budget_bytes:
        tb *= 2
    return tb


@functools.partial(jax.jit, static_argnames=("quarter", "tb_max"))
def spherization(x, scalars, quarter=True, tb_max=256):
    """Pallas-backed Spherization.forward: (B, ...) -> (B, D+1)."""
    if x.ndim > 2:
        x = x.reshape(x.shape[0], -1)       # flatten(1), NCHW -> (B, C*H*W)
    x = x.astype(jnp.float32)
    B, D = x.shape
    Dp1 = D + 1
    Npad = _round_up(Dp1, 128)              # lane-dense output slab width

    # Only tiny batches are padded (to satisfy the 8-sublane block rule); larger
    # batches are tiled with a (possibly partial) trailing block, no host copy.
    Bp = max(B, 8)
    if Bp != B:
        x = jnp.pad(x, ((0, Bp - B), (0, 0)))

    tb = _choose_tb(Bp, D, Npad, tb_max)

    out = pl.pallas_call(
        functools.partial(spherize_kernel, quarter=quarter),
        out_shape=jax.ShapeDtypeStruct((Bp, Npad), jnp.float32),
        grid_spec=pltpu.PrefetchScalarGridSpec(
            num_scalar_prefetch=0,
            grid=(pl.cdiv(Bp, tb),),
            in_specs=[
                pl.BlockSpec(memory_space=pltpu.MemorySpace.SMEM),   # 5 scalars
                pl.BlockSpec((tb, D), lambda i: (i, 0)),             # x batch tile
            ],
            out_specs=pl.BlockSpec((tb, Npad), lambda i: (i, 0)),
        ),
        compiler_params=pltpu.CompilerParams(
            dimension_semantics=("parallel",),       # batch sharding across TCs (v7x)
            vmem_limit_bytes=32 * 1024 * 1024,
        ),
    )(scalars, x)
    return out[:B, :Dp1]


def spherization_ref(x, W_theta, W_phi, b_phi, scalars):
    """Pure-JAX reference (mirrors the PyTorch forward exactly, f32 matmuls)."""
    scaling, radius, phi_L, eps, ang_scale = [float(s) for s in scalars]
    if x.ndim > 2:
        x = x.reshape(x.shape[0], -1)
    x = scaling * x
    x = ang_scale * jax.nn.sigmoid(x) + phi_L
    x = jnp.matmul(x, W_theta.T, precision=jax.lax.Precision.HIGHEST)
    v_sin = jnp.sin(x)
    v_cos = jnp.cos(x + b_phi)
    y = (jnp.matmul(jnp.log(jnp.abs(v_sin) + eps), W_phi,
                    precision=jax.lax.Precision.HIGHEST)
         + jnp.log(jnp.abs(v_cos) + eps))
    y = radius * jnp.exp(y)
    sign = jnp.where(v_cos < 0.0, -1.0, 1.0).at[:, -1].set(1.0)
    return sign * y


# TODO(synk): lb_decay() mutates phi_L between epochs (host-side training
# schedule state), not part of the forward kernel, so it is not implemented.

if __name__ == "__main__":
    key = jax.random.PRNGKey(0)
    B, C, H, W = 2, 4, 16, 16
    x = jax.random.normal(key, (B, C, H, W), dtype=jnp.float32)
    num_features = C * H * W

    W_theta, W_phi, b_phi, scalars = make_spherization_params(num_features)

    out = spherization(x, scalars)
    out = jax.block_until_ready(out)

    ref = spherization_ref(x, W_theta, W_phi, b_phi, scalars)
    assert out.shape == (B, num_features + 1), out.shape
    assert jnp.allclose(out, ref, rtol=1e-2, atol=1e-5), "mismatch vs reference"

    print("KERNEL_OK")
</pallas_src>

<mosaic_0001>
module attributes {stable_mosaic.version = 11 : i64} {
  func.func @spherize_kernel(%arg0: i32, %arg1: memref<5xf32, #tpu.memory_space<smem>>, %arg2: memref<8x1024xf32, #tpu.memory_space<vmem>>, %arg3: memref<8x1152xf32, #tpu.memory_space<vmem>>) attributes {dimension_semantics = [#tpu.dimension_semantics<parallel>], iteration_bounds = array<i64: 1>, scalar_prefetch = 0 : i64, scratch_operands = 0 : i64, tpu.core_type = #tpu.core_type<tc>, window_params = [{transform_indices = @transform_0, window_bounds = array<i64: 5>}, {transform_indices = @transform_1, window_bounds = array<i64: 8, 1024>}, {transform_indices = @transform_2, window_bounds = array<i64: 8, 1152>}]} {
    %c0 = arith.constant 0 : index
    %0 = memref.load %arg1[%c0] : memref<5xf32, #tpu.memory_space<smem>>
    %c1 = arith.constant 1 : index
    %1 = memref.load %arg1[%c1] : memref<5xf32, #tpu.memory_space<smem>>
    %c2 = arith.constant 2 : index
    %2 = memref.load %arg1[%c2] : memref<5xf32, #tpu.memory_space<smem>>
    %c3 = arith.constant 3 : index
    %3 = memref.load %arg1[%c3] : memref<5xf32, #tpu.memory_space<smem>>
    %c4 = arith.constant 4 : index
    %4 = memref.load %arg1[%c4] : memref<5xf32, #tpu.memory_space<smem>>
    %c0_0 = arith.constant 0 : index
    %c0_1 = arith.constant 0 : index
    %5 = vector.load %arg2[%c0_0, %c0_1] : memref<8x1024xf32, #tpu.memory_space<vmem>>, vector<8x1024xf32>
    %6 = vector.broadcast %0 : f32 to vector<8x1024xf32>
    %7 = arith.mulf %6, %5 : vector<8x1024xf32>
    %cst = arith.constant 0.000000e+00 : f32
    %8 = vector.broadcast %cst : f32 to vector<8x1024xf32>
    %9 = arith.subf %8, %7 : vector<8x1024xf32>
    %10 = math.exp %9 : vector<8x1024xf32>
    %cst_2 = arith.constant 1.000000e+00 : f32
    %11 = vector.broadcast %cst_2 : f32 to vector<8x1024xf32>
    %12 = arith.addf %11, %10 : vector<8x1024xf32>
    %cst_3 = arith.constant 1.000000e+00 : f32
    %13 = vector.broadcast %cst_3 : f32 to vector<8x1024xf32>
    %14 = arith.divf %13, %12 : vector<8x1024xf32>
    %15 = vector.broadcast %4 : f32 to vector<8x1024xf32>
    %16 = arith.mulf %15, %14 : vector<8x1024xf32>
    %17 = vector.broadcast %2 : f32 to vector<8x1024xf32>
    %18 = arith.addf %16, %17 : vector<8x1024xf32>
    %19 = math.sin %18 : vector<8x1024xf32>
    %20 = math.cos %18 : vector<8x1024xf32>
    %21 = vector.broadcast %3 : f32 to vector<8x1024xf32>
    %22 = arith.addf %19, %21 : vector<8x1024xf32>
    %23 = math.log %22 : vector<8x1024xf32>
    %24 = tpu.iota {dimensions = array<i32: 1>} : vector<8x1024xi32>
    %c1_i32 = arith.constant 1 : i32
    %25 = tpu.dynamic_rotate %23 by %c1_i32 dim 1 : vector<8x1024xf32>, i32 -> vector<8x1024xf32>
    %c1_i32_4 = arith.constant 1 : i32
    %26 = vector.broadcast %c1_i32_4 : i32 to vector<8x1024xi32>
    %27 = arith.cmpi sge, %24, %26 : vector<8x1024xi32>
    %cst_5 = arith.constant 0.000000e+00 : f32
    %28 = vector.broadcast %cst_5 : f32 to vector<8x1024xf32>
    %29 = arith.select %27, %25, %28 : vector<8x1024xi1>, vector<8x1024xf32>
    %30 = arith.addf %23, %29 : vector<8x1024xf32>
    %c2_i32 = arith.constant 2 : i32
    %31 = tpu.dynamic_rotate %30 by %c2_i32 dim 1 : vector<8x1024xf32>, i32 -> vector<8x1024xf32>
    %c2_i32_6 = arith.constant 2 : i32
    %32 = vector.broadcast %c2_i32_6 : i32 to vector<8x1024xi32>
    %33 = arith.cmpi sge, %24, %32 : vector<8x1024xi32>
    %cst_7 = arith.constant 0.000000e+00 : f32
    %34 = vector.broadcast %cst_7 : f32 to vector<8x1024xf32>
    %35 = arith.select %33, %31, %34 : vector<8x1024xi1>, vector<8x1024xf32>
    %36 = arith.addf %30, %35 : vector<8x1024xf32>
    %c4_i32 = arith.constant 4 : i32
    %37 = tpu.dynamic_rotate %36 by %c4_i32 dim 1 : vector<8x1024xf32>, i32 -> vector<8x1024xf32>
    %c4_i32_8 = arith.constant 4 : i32
    %38 = vector.broadcast %c4_i32_8 : i32 to vector<8x1024xi32>
    %39 = arith.cmpi sge, %24, %38 : vector<8x1024xi32>
    %cst_9 = arith.constant 0.000000e+00 : f32
    %40 = vector.broadcast %cst_9 : f32 to vector<8x1024xf32>
    %41 = arith.select %39, %37, %40 : vector<8x1024xi1>, vector<8x1024xf32>
    %42 = arith.addf %36, %41 : vector<8x1024xf32>
    %c8_i32 = arith.constant 8 : i32
    %43 = tpu.dynamic_rotate %42 by %c8_i32 dim 1 : vector<8x1024xf32>, i32 -> vector<8x1024xf32>
    %c8_i32_10 = arith.constant 8 : i32
    %44 = vector.broadcast %c8_i32_10 : i32 to vector<8x1024xi32>
    %45 = arith.cmpi sge, %24, %44 : vector<8x1024xi32>
    %cst_11 = arith.constant 0.000000e+00 : f32
    %46 = vector.broadcast %cst_11 : f32 to vector<8x1024xf32>
    %47 = arith.select %45, %43, %46 : vector<8x1024xi1>, vector<8x1024xf32>
    %48 = arith.addf %42, %47 : vector<8x1024xf32>
    %c16_i32 = arith.constant 16 : i32
    %49 = tpu.dynamic_rotate %48 by %c16_i32 dim 1 : vector<8x1024xf32>, i32 -> vector<8x1024xf32>
    %c16_i32_12 = arith.constant 16 : i32
    %50 = vector.broadcast %c16_i32_12 : i32 to vector<8x1024xi32>
    %51 = arith.cmpi sge, %24, %50 : vector<8x1024xi32>
    %cst_13 = arith.constant 0.000000e+00 : f32
    %52 = vector.broadcast %cst_13 : f32 to vector<8x1024xf32>
    %53 = arith.select %51, %49, %52 : vector<8x1024xi1>, vector<8x1024xf32>
    %54 = arith.addf %48, %53 : vector<8x1024xf32>
    %c32_i32 = arith.constant 32 : i32
    %55 = tpu.dynamic_rotate %54 by %c32_i32 dim 1 : vector<8x1024xf32>, i32 -> vector<8x1024xf32>
    %c32_i32_14 = arith.constant 32 : i32
    %56 = vector.broadcast %c32_i32_14 : i32 to vector<8x1024xi32>
    %57 = arith.cmpi sge, %24, %56 : vector<8x1024xi32>
    %cst_15 = arith.constant 0.000000e+00 : f32
    %58 = vector.broadcast %cst_15 : f32 to vector<8x1024xf32>
    %59 = arith.select %57, %55, %58 : vector<8x1024xi1>, vector<8x1024xf32>
    %60 = arith.addf %54, %59 : vector<8x1024xf32>
    %c64_i32 = arith.constant 64 : i32
    %61 = tpu.dynamic_rotate %60 by %c64_i32 dim 1 : vector<8x1024xf32>, i32 -> vector<8x1024xf32>
    %c64_i32_16 = arith.constant 64 : i32
    %62 = vector.broadcast %c64_i32_16 : i32 to vector<8x1024xi32>
    %63 = arith.cmpi sge, %24, %62 : vector<8x1024xi32>
    %cst_17 = arith.constant 0.000000e+00 : f32
    %64 = vector.broadcast %cst_17 : f32 to vector<8x1024xf32>
    %65 = arith.select %63, %61, %64 : vector<8x1024xi1>, vector<8x1024xf32>
    %66 = arith.addf %60, %65 : vector<8x1024xf32>
    %c128_i32 = arith.constant 128 : i32
    %67 = tpu.dynamic_rotate %66 by %c128_i32 dim 1 : vector<8x1024xf32>, i32 -> vector<8x1024xf32>
    %c128_i32_18 = arith.constant 128 : i32
    %68 = vector.broadcast %c128_i32_18 : i32 to vector<8x1024xi32>
    %69 = arith.cmpi sge, %24, %68 : vector<8x1024xi32>
    %cst_19 = arith.constant 0.000000e+00 : f32
    %70 = vector.broadcast %cst_19 : f32 to vector<8x1024xf32>
    %71 = arith.select %69, %67, %70 : vector<8x1024xi1>, vector<8x1024xf32>
    %72 = arith.addf %66, %71 : vector<8x1024xf32>
    %c256_i32 = arith.constant 256 : i32
    %73 = tpu.dynamic_rotate %72 by %c256_i32 dim 1 : vector<8x1024xf32>, i32 -> vector<8x1024xf32>
    %c256_i32_20 = arith.constant 256 : i32
    %74 = vector.broadcast %c256_i32_20 : i32 to vector<8x1024xi32>
    %75 = arith.cmpi sge, %24, %74 : vector<8x1024xi32>
    %cst_21 = arith.constant 0.000000e+00 : f32
    %76 = vector.broadcast %cst_21 : f32 to vector<8x1024xf32>
    %77 = arith.select %75, %73, %76 : vector<8x1024xi1>, vector<8x1024xf32>
    %78 = arith.addf %72, %77 : vector<8x1024xf32>
    %c512_i32 = arith.constant 512 : i32
    %79 = tpu.dynamic_rotate %78 by %c512_i32 dim 1 : vector<8x1024xf32>, i32 -> vector<8x1024xf32>
    %c512_i32_22 = arith.constant 512 : i32
    %80 = vector.broadcast %c512_i32_22 : i32 to vector<8x1024xi32>
    %81 = arith.cmpi sge, %24, %80 : vector<8x1024xi32>
    %cst_23 = arith.constant 0.000000e+00 : f32
    %82 = vector.broadcast %cst_23 : f32 to vector<8x1024xf32>
    %83 = arith.select %81, %79, %82 : vector<8x1024xi1>, vector<8x1024xf32>
    %84 = arith.addf %78, %83 : vector<8x1024xf32>
    %c0_i32 = arith.constant 0 : i32
    %85 = vector.broadcast %c0_i32 : i32 to vector<8x1024xi32>
    %86 = arith.cmpi eq, %24, %85 : vector<8x1024xi32>
    %c1_i32_24 = arith.constant 1 : i32
    %87 = tpu.dynamic_rotate %84 by %c1_i32_24 dim 1 : vector<8x1024xf32>, i32 -> vector<8x1024xf32>
    %cst_25 = arith.constant 0.000000e+00 : f32
    %88 = vector.broadcast %cst_25 : f32 to vector<8x1024xf32>
    %89 = arith.select %86, %88, %87 : vector<8x1024xi1>, vector<8x1024xf32>
    %90 = vector.broadcast %3 : f32 to vector<8x1024xf32>
    %91 = arith.addf %20, %90 : vector<8x1024xf32>
    %92 = math.exp %89 : vector<8x1024xf32>
    %93 = vector.broadcast %1 : f32 to vector<8x1024xf32>
    %94 = arith.mulf %93, %92 : vector<8x1024xf32>
    %95 = arith.mulf %94, %91 : vector<8x1024xf32>
    %c0_26 = arith.constant 0 : index
    %c0_27 = arith.constant 0 : index
    %96 = vector.load %arg3[%c0_26, %c0_27] : memref<8x1152xf32, #tpu.memory_space<vmem>>, vector<8x1024xf32>
    tpu.vector_store %arg3[%c0_26, %c0_27], %95 {strides = array<i32>} : memref<8x1152xf32, #tpu.memory_space<vmem>>, vector<8x1024xf32>,
    %97 = vector.extract_strided_slice %84 {offsets = [0, 1023], sizes = [8, 1], strides = [1, 1]} : vector<8x1024xf32> to vector<8x1xf32>
    %98 = math.exp %97 : vector<8x1xf32>
    %99 = vector.broadcast %1 : f32 to vector<8x1xf32>
    %100 = arith.mulf %99, %98 : vector<8x1xf32>
    %101 = vector.shape_cast %100 : vector<8x1xf32> to vector<8x1xf32>
    %102 = vector.broadcast %101 : vector<8x1xf32> to vector<8x128xf32>
    %c0_28 = arith.constant 0 : index
    %c1024 = arith.constant 1024 : index
    %103 = vector.load %arg3[%c0_28, %c1024] : memref<8x1152xf32, #tpu.memory_space<vmem>>, vector<8x128xf32>
    tpu.vector_store %arg3[%c0_28, %c1024], %102 {strides = array<i32>} : memref<8x1152xf32, #tpu.memory_space<vmem>>, vector<8x128xf32>,
    return
  }
  func.func @transform_0(%arg0: i32) -> i32 {
    %c0_i32 = arith.constant 0 : i32
    %c0_i32_0 = arith.constant 0 : i32
    return %c0_i32 : i32
  }
  func.func @transform_1(%arg0: i32) -> (i32, i32) {
    %c0_i32 = arith.constant 0 : i32
    %c0_i32_0 = arith.constant 0 : i32
    return %arg0, %c0_i32 : i32, i32
  }
  func.func @transform_2(%arg0: i32) -> (i32, i32) {
    %c0_i32 = arith.constant 0 : i32
    %c0_i32_0 = arith.constant 0 : i32
    return %arg0, %c0_i32 : i32, i32
  }
}

</mosaic_0001>

<llo_original>
// kernel: spherization.1
$region0: #{spherization.1}
  #allocation0 [shape = 'u32[]', space=smem, size = 0x4, offset = 0x4, fixed_abs, tag = 'smem constant byte address 0x4 - core index']
  #allocation1 [shape = 'u32[144,128]{1,0:T(1,128)}', space=vmem, size = 0x12000, scoped, tag = 'internal scratch']
  %s0 = inlined_call_operand.vmem [shape: f32[5], index: 0, kind: input, shape index: {}]
  %s1 = inlined_call_operand.vmem [shape: f32[8,1024], index: 1, kind: input, shape index: {}]
  %s2 = inlined_call_operand.vmem [shape: f32[8,1152], index: 2, kind: output, shape index: {}]
  %s3 = sld [smem:[#allocation0]]
  $region22: #{spherization.1} parent=0
    _
  %s5 = ssub.s32 1, %s3
  %s6 = scalar_select 0, %s5, %s3
  $region1: #{spherization.1} parent=0
    #allocation2 [shape = 'u8[512]{0}', space=smem, size = 0x200, scoped, tag = 'input window, operand 0, single buffered']
    #allocation3 [shape = 's32[1]{0}', space=sflag, size = 0x4, scoped, tag = 'scoped memory for spherization.1']
    %7 = vsyncpa [#allocation3], 0
    // Predicated region
    $region2: #{spherization.1} parent=1 // pred_check
      _
    $region3: #{spherization.1} parent=1 // pred_check_branch
      %9 = sbr.rel (0) target = $region5
    $region4: #{spherization.1} parent=1 // pred_region
      %s11 = ssub.s32 16, 16
      %12 = vsyncadd [#allocation3], %s11
      %s14 = sshll.u32 %s0, 4
      %s15 = int_to_ptr.vmem [resolvable:$true] %s14
      %17 = dma.vmem_to_smem %s15, 16, [#allocation2], [#allocation3]
    $region5: #{spherization.1} parent=1 // pred_fallthru
      _
    // Predicated region
    $region6: #{spherization.1} parent=1 // pred_check
      _
    $region7: #{spherization.1} parent=1 // pred_check_branch
      %19 = sbr.rel (0) target = $region9
    $region8: #{spherization.1} parent=1 // pred_region
      _
    $region9: #{spherization.1} parent=1 // pred_fallthru
      _
    // Predicated region
    $region10: #{spherization.1} parent=1 // pred_check
      _
    $region11: #{spherization.1} parent=1 // pred_check_branch
      %21 = sbr.rel (0) target = $region13
    $region12: #{spherization.1} parent=1 // pred_region
      %22 = dma.done [#allocation3], 16
    $region13: #{spherization.1} parent=1 // pred_fallthru
      _
    %23 = sfence
    %s24 = sld [smem:[#allocation2]]
    %s25 = sld [smem:[#allocation2 + $0x1]]
    %s26 = sld [smem:[#allocation2 + $0x2]]
    %s27 = sld [smem:[#allocation2 + $0x3]]
    %s28 = sld [smem:[#allocation2 + $0x4]]
    %v29 = vld [vmem:[%s1] sm:$0xff]
    %v30 = vld [vmem:[%s1 + $0x8] sm:$0xff]
    %v31 = vld [vmem:[%s1 + $0x10] sm:$0xff]
    %v32 = vld [vmem:[%s1 + $0x18] sm:$0xff]
    %v33 = vld [vmem:[%s1 + $0x20] sm:$0xff]
    %v34 = vld [vmem:[%s1 + $0x28] sm:$0xff]
    %v35 = vld [vmem:[%s1 + $0x30] sm:$0xff]
    %v36 = vld [vmem:[%s1 + $0x38] sm:$0xff]
    %v37 = vstv %s24
    %v38 = vmul.f32 %v37, %v29
    %v39 = vmul.f32 %v37, %v30
    %v40 = vmul.f32 %v37, %v31
    %v41 = vmul.f32 %v37, %v32
    %v42 = vmul.f32 %v37, %v33
    %v43 = vmul.f32 %v37, %v34
    %v44 = vmul.f32 %v37, %v35
    %v45 = vmul.f32 %v37, %v36
    %v46 = vsub.f32 0.0, %v38
    %v47 = vsub.f32 0.0, %v39
    %v48 = vsub.f32 0.0, %v40
    %v49 = vsub.f32 0.0, %v41
    %v50 = vsub.f32 0.0, %v42
    %v51 = vsub.f32 0.0, %v43
    %v52 = vsub.f32 0.0, %v44
    %v53 = vsub.f32 0.0, %v45
    %v54 = vmul.f32 %v46, 1.442695
    %v55 = vpow.pop %v54
    %v56 = vmul.f32 %v47, 1.442695
    %v57 = vpow.pop %v56
    %v58 = vmul.f32 %v48, 1.442695
    %v59 = vpow.pop %v58
    %v60 = vmul.f32 %v49, 1.442695
    %v61 = vpow.pop %v60
    %v62 = vmul.f32 %v50, 1.442695
    %v63 = vpow.pop %v62
    %v64 = vmul.f32 %v51, 1.442695
    %v65 = vpow.pop %v64
    %v66 = vmul.f32 %v52, 1.442695
    %v67 = vpow.pop %v66
    %v68 = vmul.f32 %v53, 1.442695
    %v69 = vpow.pop %v68
    %v70 = vadd.f32 %v55, 1.0
    %v71 = vadd.f32 %v57, 1.0
    %v72 = vadd.f32 %v59, 1.0
    %v73 = vadd.f32 %v61, 1.0
    %v74 = vadd.f32 %v63, 1.0
    %v75 = vadd.f32 %v65, 1.0
    %v76 = vadd.f32 %v67, 1.0
    %v77 = vadd.f32 %v69, 1.0
    %v78 = vrcp.pop %v70
    %v79 = vmul.f32 1.0, %v78
    %v80 = vrcp.pop %v71
    %v81 = vmul.f32 1.0, %v80
    %v82 = vrcp.pop %v72
    %v83 = vmul.f32 1.0, %v82
    %v84 = vrcp.pop %v73
    %v85 = vmul.f32 1.0, %v84
    %v86 = vrcp.pop %v74
    %v87 = vmul.f32 1.0, %v86
    %v88 = vrcp.pop %v75
    %v89 = vmul.f32 1.0, %v88
    %v90 = vrcp.pop %v76
    %v91 = vmul.f32 1.0, %v90
    %v92 = vrcp.pop %v77
    %v93 = vmul.f32 1.0, %v92
    %v94 = vstv %s28
    %v95 = vmul.f32 %v94, %v79
    %v96 = vmul.f32 %v94, %v81
    %v97 = vmul.f32 %v94, %v83
    %v98 = vmul.f32 %v94, %v85
    %v99 = vmul.f32 %v94, %v87
    %v100 = vmul.f32 %v94, %v89
    %v101 = vmul.f32 %v94, %v91
    %v102 = vmul.f32 %v94, %v93
    %v103 = vstv %s26
    %v104 = vadd.f32 %v95, %v103
    %v105 = vadd.f32 %v96, %v103
    %v106 = vadd.f32 %v97, %v103
    %v107 = vadd.f32 %v98, %v103
    %v108 = vadd.f32 %v99, %v103
    %v109 = vadd.f32 %v100, %v103
    %v110 = vadd.f32 %v101, %v103
    %v111 = vadd.f32 %v102, %v103
    %v112 = vand.u32 2147483647, %v104
    %vm113 = vcmp.le.f32.partialorder %v112, 0.7853982
    %vm114 = vcmp.lt.s32.totalorder %v104, 0
    %v115 = vand.u32 %v104, 2139095040
    %v116 = vshrl.u32 %v115, 23
    %v117 = vsub.s32 %v116, 127
    %v118 = vand.u32 2147483647, %v104
    %v119 = vand.u32 %v118, 8388607
    %v120 = vor.u32 %v119, 8388608
    %v121 = vsub.s32 0, %v120
    %v122 = vadd.s32 %v117, 1
    %vm123 = vcmp.gt.s32.totalorder %v122, 0
    %v124 = vsel %vm123, %v122, 0
    %v125 = vshrl.u32 %v124, 5
    %v126 = vand.u32 %v124, 31
    %v127 = vsub.s32 32, %v126
    %v128 = vshrl.u32 683565275, %v127
    %v129 = vshll.u32 683565275, %v126
    %v130 = vshrl.u32 2475754826, %v127
    %v131 = vor.u32 %v129, %v130
    %v132 = vshll.u32 2475754826, %v126
    %v133 = vshrl.u32 2131351028, %v127
    %v134 = vor.u32 %v132, %v133
    %v135 = vshll.u32 2131351028, %v126
    %v136 = vshrl.u32 2102212464, %v127
    %v137 = vor.u32 %v135, %v136
    %v138 = vshll.u32 2102212464, %v126
    %v139 = vshrl.u32 920167782, %v127
    %v140 = vor.u32 %v138, %v139
    %v141 = vshll.u32 920167782, %v126
    %v142 = vshrl.u32 1326507024, %v127
    %v143 = vor.u32 %v141, %v142
    %vm144 = vcmp.lt.s32.totalorder %v125, 1
    %vm145 = vcmp.lt.s32.totalorder %v125, 2
    %vm146 = vcmp.lt.s32.totalorder %v125, 3
    %vm147 = vcmp.lt.s32.totalorder %v125, 4
    %v148 = vsel %vm144, %v128, %v131
    %v149 = vsel %vm147, %v137, 2102212464
    %v150 = vsel %vm146, %v134, %v149
    %v151 = vsel %vm145, %v148, %v150
    %v152 = vsel %vm144, %v131, %v134
    %v153 = vsel %vm147, %v140, 920167782
    %v154 = vsel %vm146, %v137, %v153
    %v155 = vsel %vm145, %v152, %v154
    %v156 = vsel %vm144, %v134, %v137
    %v157 = vsel %vm147, %v143, 1326507024
    %v158 = vsel %vm146, %v140, %v157
    %v159 = vsel %vm145, %v156, %v158
    %v160 = vshll.u32 %v120, 8
    %v161 = vmul.u32.u64.compose %v160, %v159
    %v162 = vextract.low.u32 %v161
    %v163 = vextract.high.u32 %v161
    %v164 = vmul.u32.u64.compose %v160, %v155
    %v165 = vextract.low.u32 %v164
    %v166 = vextract.high.u32 %v164
    %v167 = vmul.u32 %v160, %v151
    %v168 = vadd.s32 %v163, %v165
    %vm169 = vc.u32 %v163, %v165
    %v170 = vadd.s32 %v166, 1
    %v171 = vsel %vm169, %v170, %v166
    %v172 = vadd.s32 %v167, %v171
    %v173 = vadd.s32 %v172, 536870912
    %v174 = vshrl.u32 %v173, 30
    %v175 = vshll.u32 %v174, 30
    %v176 = vsub.s32 %v172, %v175
    %vm177 = vcmp.lt.s32.totalorder %v176, 0
    %v178 = vsub.s32 0, %v176
    %v179 = vsel %vm177, %v178, %v176
    %v180 = vclz %v179
    %v181 = vsub.s32 %v180, 2
    %vm182 = vcmp.gt.s32.totalorder 0, %v181
    %v183 = vsel %vm182, 0, %v181
    %v184 = vsub.s32 32, %v183
    %v185 = vshll.u32 %v176, %v183
    %v186 = vshrl.u32 %v168, %v184
    %v187 = vor.u32 %v185, %v186
    %v188 = vsub.s32 4294967266, %v183
    %v189 = vadd.s32 %v188, 127
    %v190 = vshll.u32 %v189, 23
    %v191 = vor.u32 4788187, %v190
    %v192 = vand.u32 2147483647, %v191
    %v194 = vcvt.s32.f32 %v187
    %v195 = vmul.f32 %v194, %v192
    %v196 = vxor.u32 %v195, 2147483648
    %v197 = vsel %vm114, %v196, %v195
    %v198 = vsub.s32 4, %v174
    %v199 = vsel %vm114, %v198, %v174
    %v200 = vsel %vm113, %v104, %v197
    %v201 = vsel %vm113, 0, %v199
    %v202 = vcosq.f32.pop %v200
    %v203 = vsinq.f32.pop %v200
    %vm204 = vweird.f32 %v104
    %v205 = vadd.s32 %v201, 3
    %v206 = vand.u32 %v205, 3
    %vm207 = vcmp.lt.s32.totalorder %v206, 2
    %vm208 = vcmp.eq.s32.totalorder %v206, 0
    %v209 = vxor.u32 %v203, 2147483648
    %v210 = vsel %vm208, %v202, %v209
    %vm211 = vcmp.eq.s32.totalorder %v206, 2
    %v212 = vxor.u32 %v202, 2147483648
    %v213 = vsel %vm211, %v212, %v203
    %v214 = vsel %vm207, %v210, %v213
    %v215 = vsel %vm204, nan, %v214
    %v216 = vand.u32 2147483647, %v105
    %vm217 = vcmp.le.f32.partialorder %v216, 0.7853982
    %vm218 = vcmp.lt.s32.totalorder %v105, 0
    %v219 = vand.u32 %v105, 2139095040
    %v220 = vshrl.u32 %v219, 23
    %v221 = vsub.s32 %v220, 127
    %v222 = vand.u32 2147483647, %v105
    %v223 = vand.u32 %v222, 8388607
    %v224 = vor.u32 %v223, 8388608
    %v225 = vsub.s32 0, %v224
    %v226 = vadd.s32 %v221, 1
    %vm227 = vcmp.gt.s32.totalorder %v226, 0
    %v228 = vsel %vm227, %v226, 0
    %v229 = vshrl.u32 %v228, 5
    %v230 = vand.u32 %v228, 31
    %v231 = vsub.s32 32, %v230
    %v232 = vshrl.u32 683565275, %v231
    %v233 = vshll.u32 683565275, %v230
    %v234 = vshrl.u32 2475754826, %v231
    %v235 = vor.u32 %v233, %v234
    %v236 = vshll.u32 2475754826, %v230
    %v237 = vshrl.u32 2131351028, %v231
    %v238 = vor.u32 %v236, %v237
    %v239 = vshll.u32 2131351028, %v230
    %v240 = vshrl.u32 2102212464, %v231
    %v241 = vor.u32 %v239, %v240
    %v242 = vshll.u32 2102212464, %v230
    %v243 = vshrl.u32 920167782, %v231
    %v244 = vor.u32 %v242, %v243
    %v245 = vshll.u32 920167782, %v230
    %v246 = vshrl.u32 1326507024, %v231
    %v247 = vor.u32 %v245, %v246
    %vm248 = vcmp.lt.s32.totalorder %v229, 1
    %vm249 = vcmp.lt.s32.totalorder %v229, 2
    %vm250 = vcmp.lt.s32.totalorder %v229, 3
    %vm251 = vcmp.lt.s32.totalorder %v229, 4
    %v252 = vsel %vm248, %v232, %v235
    %v253 = vsel %vm251, %v241, 2102212464
    %v254 = vsel %vm250, %v238, %v253
    %v255 = vsel %vm249, %v252, %v254
    %v256 = vsel %vm248, %v235, %v238
    %v257 = vsel %vm251, %v244, 920167782
    %v258 = vsel %vm250, %v241, %v257
    %v259 = vsel %vm249, %v256, %v258
    %v260 = vsel %vm248, %v238, %v241
    %v261 = vsel %vm251, %v247, 1326507024
    %v262 = vsel %vm250, %v244, %v261
    %v263 = vsel %vm249, %v260, %v262
    %v264 = vshll.u32 %v224, 8
    %v265 = vmul.u32.u64.compose %v264, %v263
    %v266 = vextract.low.u32 %v265
    %v267 = vextract.high.u32 %v265
    %v268 = vmul.u32.u64.compose %v264, %v259
    %v269 = vextract.low.u32 %v268
    %v270 = vextract.high.u32 %v268
    %v271 = vmul.u32 %v264, %v255
    %v272 = vadd.s32 %v267, %v269
    %vm273 = vc.u32 %v267, %v269
    %v274 = vadd.s32 %v270, 1
    %v275 = vsel %vm273, %v274, %v270
    %v276 = vadd.s32 %v271, %v275
    %v277 = vadd.s32 %v276, 536870912
    %v278 = vshrl.u32 %v277, 30
    %v279 = vshll.u32 %v278, 30
    %v280 = vsub.s32 %v276, %v279
    %vm281 = vcmp.lt.s32.totalorder %v280, 0
    %v282 = vsub.s32 0, %v280
    %v283 = vsel %vm281, %v282, %v280
    %v284 = vclz %v283
    %v285 = vsub.s32 %v284, 2
    %vm286 = vcmp.gt.s32.totalorder 0, %v285
    %v287 = vsel %vm286, 0, %v285
    %v288 = vsub.s32 32, %v287
    %v289 = vshll.u32 %v280, %v287
    %v290 = vshrl.u32 %v272, %v288
    %v291 = vor.u32 %v289, %v290
    %v292 = vsub.s32 4294967266, %v287
    %v293 = vadd.s32 %v292, 127
    %v294 = vshll.u32 %v293, 23
    %v295 = vor.u32 4788187, %v294
    %v296 = vand.u32 2147483647, %v295
    %v298 = vcvt.s32.f32 %v291
    %v299 = vmul.f32 %v298, %v296
    %v300 = vxor.u32 %v299, 2147483648
    %v301 = vsel %vm218, %v300, %v299
    %v302 = vsub.s32 4, %v278
    %v303 = vsel %vm218, %v302, %v278
    %v304 = vsel %vm217, %v105, %v301
    %v305 = vsel %vm217, 0, %v303
    %v306 = vcosq.f32.pop %v304
    %v307 = vsinq.f32.pop %v304
    %vm308 = vweird.f32 %v105
    %v309 = vadd.s32 %v305, 3
    %v310 = vand.u32 %v309, 3
    %vm311 = vcmp.lt.s32.totalorder %v310, 2
    %vm312 = vcmp.eq.s32.totalorder %v310, 0
    %v313 = vxor.u32 %v307, 2147483648
    %v314 = vsel %vm312, %v306, %v313
    %vm315 = vcmp.eq.s32.totalorder %v310, 2
    %v316 = vxor.u32 %v306, 2147483648
    %v317 = vsel %vm315, %v316, %v307
    %v318 = vsel %vm311, %v314, %v317
    %v319 = vsel %vm308, nan, %v318
    %v320 = vand.u32 2147483647, %v106
    %vm321 = vcmp.le.f32.partialorder %v320, 0.7853982
    %vm322 = vcmp.lt.s32.totalorder %v106, 0
    %v323 = vand.u32 %v106, 2139095040
    %v324 = vshrl.u32 %v323, 23
    %v325 = vsub.s32 %v324, 127
    %v326 = vand.u32 2147483647, %v106
    %v327 = vand.u32 %v326, 8388607
    %v328 = vor.u32 %v327, 8388608
    %v329 = vsub.s32 0, %v328
    %v330 = vadd.s32 %v325, 1
    %vm331 = vcmp.gt.s32.totalorder %v330, 0
    %v332 = vsel %vm331, %v330, 0
    %v333 = vshrl.u32 %v332, 5
    %v334 = vand.u32 %v332, 31
    %v335 = vsub.s32 32, %v334
    %v336 = vshrl.u32 683565275, %v335
    %v337 = vshll.u32 683565275, %v334
    %v338 = vshrl.u32 2475754826, %v335
    %v339 = vor.u32 %v337, %v338
    %v340 = vshll.u32 2475754826, %v334
    %v341 = vshrl.u32 2131351028, %v335
    %v342 = vor.u32 %v340, %v341
    %v343 = vshll.u32 2131351028, %v334
    %v344 = vshrl.u32 2102212464, %v335
    %v345 = vor.u32 %v343, %v344
    %v346 = vshll.u32 2102212464, %v334
    %v347 = vshrl.u32 920167782, %v335
    %v348 = vor.u32 %v346, %v347
    %v349 = vshll.u32 920167782, %v334
    %v350 = vshrl.u32 1326507024, %v335
    %v351 = vor.u32 %v349, %v350
    %vm352 = vcmp.lt.s32.totalorder %v333, 1
    %vm353 = vcmp.lt.s32.totalorder %v333, 2
    %vm354 = vcmp.lt.s32.totalorder %v333, 3
    %vm355 = vcmp.lt.s32.totalorder %v333, 4
    %v356 = vsel %vm352, %v336, %v339
    %v357 = vsel %vm355, %v345, 2102212464
    %v358 = vsel %vm354, %v342, %v357
    %v359 = vsel %vm353, %v356, %v358
    %v360 = vsel %vm352, %v339, %v342
    %v361 = vsel %vm355, %v348, 920167782
    %v362 = vsel %vm354, %v345, %v361
    %v363 = vsel %vm353, %v360, %v362
    %v364 = vsel %vm352, %v342, %v345
    %v365 = vsel %vm355, %v351, 1326507024
    %v366 = vsel %vm354, %v348, %v365
    %v367 = vsel %vm353, %v364, %v366
    %v368 = vshll.u32 %v328, 8
    %v369 = vmul.u32.u64.compose %v368, %v367
    %v370 = vextract.low.u32 %v369
    %v371 = vextract.high.u32 %v369
    %v372 = vmul.u32.u64.compose %v368, %v363
    %v373 = vextract.low.u32 %v372
    %v374 = vextract.high.u32 %v372
    %v375 = vmul.u32 %v368, %v359
    %v376 = vadd.s32 %v371, %v373
    %vm377 = vc.u32 %v371, %v373
    %v378 = vadd.s32 %v374, 1
    %v379 = vsel %vm377, %v378, %v374
    %v380 = vadd.s32 %v375, %v379
    %v381 = vadd.s32 %v380, 536870912
    %v382 = vshrl.u32 %v381, 30
    %v383 = vshll.u32 %v382, 30
    %v384 = vsub.s32 %v380, %v383
    %vm385 = vcmp.lt.s32.totalorder %v384, 0
    %v386 = vsub.s32 0, %v384
    %v387 = vsel %vm385, %v386, %v384
    %v388 = vclz %v387
    %v389 = vsub.s32 %v388, 2
    %vm390 = vcmp.gt.s32.totalorder 0, %v389
    %v391 = vsel %vm390, 0, %v389
    %v392 = vsub.s32 32, %v391
    %v393 = vshll.u32 %v384, %v391
    %v394 = vshrl.u32 %v376, %v392
    %v395 = vor.u32 %v393, %v394
    %v396 = vsub.s32 4294967266, %v391
    %v397 = vadd.s32 %v396, 127
    %v398 = vshll.u32 %v397, 23
    %v399 = vor.u32 4788187, %v398
    %v400 = vand.u32 2147483647, %v399
    %v402 = vcvt.s32.f32 %v395
    %v403 = vmul.f32 %v402, %v400
    %v404 = vxor.u32 %v403, 2147483648
    %v405 = vsel %vm322, %v404, %v403
    %v406 = vsub.s32 4, %v382
    %v407 = vsel %vm322, %v406, %v382
    %v408 = vsel %vm321, %v106, %v405
    %v409 = vsel %vm321, 0, %v407
    %v410 = vcosq.f32.pop %v408
    %v411 = vsinq.f32.pop %v408
    %vm412 = vweird.f32 %v106
    %v413 = vadd.s32 %v409, 3
    %v414 = vand.u32 %v413, 3
    %vm415 = vcmp.lt.s32.totalorder %v414, 2
    %vm416 = vcmp.eq.s32.totalorder %v414, 0
    %v417 = vxor.u32 %v411, 2147483648
    %v418 = vsel %vm416, %v410, %v417
    %vm419 = vcmp.eq.s32.totalorder %v414, 2
    %v420 = vxor.u32 %v410, 2147483648
    %v421 = vsel %vm419, %v420, %v411
    %v422 = vsel %vm415, %v418, %v421
    %v423 = vsel %vm412, nan, %v422
    %v424 = vand.u32 2147483647, %v107
    %vm425 = vcmp.le.f32.partialorder %v424, 0.7853982
    %vm426 = vcmp.lt.s32.totalorder %v107, 0
    %v427 = vand.u32 %v107, 2139095040
    %v428 = vshrl.u32 %v427, 23
    %v429 = vsub.s32 %v428, 127
    %v430 = vand.u32 2147483647, %v107
    %v431 = vand.u32 %v430, 8388607
    %v432 = vor.u32 %v431, 8388608
    %v433 = vsub.s32 0, %v432
    %v434 = vadd.s32 %v429, 1
    %vm435 = vcmp.gt.s32.totalorder %v434, 0
    %v436 = vsel %vm435, %v434, 0
    %v437 = vshrl.u32 %v436, 5
    %v438 = vand.u32 %v436, 31
    %v439 = vsub.s32 32, %v438
    %v440 = vshrl.u32 683565275, %v439
    %v441 = vshll.u32 683565275, %v438
    %v442 = vshrl.u32 2475754826, %v439
    %v443 = vor.u32 %v441, %v442
    %v444 = vshll.u32 2475754826, %v438
    %v445 = vshrl.u32 2131351028, %v439
    %v446 = vor.u32 %v444, %v445
    %v447 = vshll.u32 2131351028, %v438
    %v448 = vshrl.u32 2102212464, %v439
    %v449 = vor.u32 %v447, %v448
    %v450 = vshll.u32 2102212464, %v438
    %v451 = vshrl.u32 920167782, %v439
    %v452 = vor.u32 %v450, %v451
    %v453 = vshll.u32 920167782, %v438
    %v454 = vshrl.u32 1326507024, %v439
    %v455 = vor.u32 %v453, %v454
    %vm456 = vcmp.lt.s32.totalorder %v437, 1
    %vm457 = vcmp.lt.s32.totalorder %v437, 2
    %vm458 = vcmp.lt.s32.totalorder %v437, 3
    %vm459 = vcmp.lt.s32.totalorder %v437, 4
    %v460 = vsel %vm456, %v440, %v443
    %v461 = vsel %vm459, %v449, 2102212464
    %v462 = vsel %vm458, %v446, %v461
    %v463 = vsel %vm457, %v460, %v462
    %v464 = vsel %vm456, %v443, %v446
    %v465 = vsel %vm459, %v452, 920167782
    %v466 = vsel %vm458, %v449, %v465
    %v467 = vsel %vm457, %v464, %v466
    %v468 = vsel %vm456, %v446, %v449
    %v469 = vsel %vm459, %v455, 1326507024
    %v470 = vsel %vm458, %v452, %v469
    %v471 = vsel %vm457, %v468, %v470
    %v472 = vshll.u32 %v432, 8
    %v473 = vmul.u32.u64.compose %v472, %v471
    %v474 = vextract.low.u32 %v473
    %v475 = vextract.high.u32 %v473
    %v476 = vmul.u32.u64.compose %v472, %v467
    %v477 = vextract.low.u32 %v476
    %v478 = vextract.high.u32 %v476
    %v479 = vmul.u32 %v472, %v463
    %v480 = vadd.s32 %v475, %v477
    %vm481 = vc.u32 %v475, %v477
    %v482 = vadd.s32 %v478, 1
    %v483 = vsel %vm481, %v482, %v478
    %v484 = vadd.s32 %v479, %v483
    %v485 = vadd.s32 %v484, 536870912
    %v486 = vshrl.u32 %v485, 30
    %v487 = vshll.u32 %v486, 30
    %v488 = vsub.s32 %v484, %v487
    %vm489 = vcmp.lt.s32.totalorder %v488, 0
    %v490 = vsub.s32 0, %v488
    %v491 = vsel %vm489, %v490, %v488
    %v492 = vclz %v491
    %v493 = vsub.s32 %v492, 2
    %vm494 = vcmp.gt.s32.totalorder 0, %v493
    %v495 = vsel %vm494, 0, %v493
    %v496 = vsub.s32 32, %v495
    %v497 = vshll.u32 %v488, %v495
    %v498 = vshrl.u32 %v480, %v496
    %v499 = vor.u32 %v497, %v498
    %v500 = vsub.s32 4294967266, %v495
    %v501 = vadd.s32 %v500, 127
    %v502 = vshll.u32 %v501, 23
    %v503 = vor.u32 4788187, %v502
    %v504 = vand.u32 2147483647, %v503
    %v506 = vcvt.s32.f32 %v499
    %v507 = vmul.f32 %v506, %v504
    %v508 = vxor.u32 %v507, 2147483648
    %v509 = vsel %vm426, %v508, %v507
    %v510 = vsub.s32 4, %v486
    %v511 = vsel %vm426, %v510, %v486
    %v512 = vsel %vm425, %v107, %v509
    %v513 = vsel %vm425, 0, %v511
    %v514 = vcosq.f32.pop %v512
    %v515 = vsinq.f32.pop %v512
    %vm516 = vweird.f32 %v107
    %v517 = vadd.s32 %v513, 3
    %v518 = vand.u32 %v517, 3
    %vm519 = vcmp.lt.s32.totalorder %v518, 2
    %vm520 = vcmp.eq.s32.totalorder %v518, 0
    %v521 = vxor.u32 %v515, 2147483648
    %v522 = vsel %vm520, %v514, %v521
    %vm523 = vcmp.eq.s32.totalorder %v518, 2
    %v524 = vxor.u32 %v514, 2147483648
    %v525 = vsel %vm523, %v524, %v515
    %v526 = vsel %vm519, %v522, %v525
    %v527 = vsel %vm516, nan, %v526
    %v528 = vand.u32 2147483647, %v108
    %vm529 = vcmp.le.f32.partialorder %v528, 0.7853982
    %vm530 = vcmp.lt.s32.totalorder %v108, 0
    %v531 = vand.u32 %v108, 2139095040
    %v532 = vshrl.u32 %v531, 23
    %v533 = vsub.s32 %v532, 127
    %v534 = vand.u32 2147483647, %v108
    %v535 = vand.u32 %v534, 8388607
    %v536 = vor.u32 %v535, 8388608
    %v537 = vsub.s32 0, %v536
    %v538 = vadd.s32 %v533, 1
    %vm539 = vcmp.gt.s32.totalorder %v538, 0
    %v540 = vsel %vm539, %v538, 0
    %v541 = vshrl.u32 %v540, 5
    %v542 = vand.u32 %v540, 31
    %v543 = vsub.s32 32, %v542
    %v544 = vshrl.u32 683565275, %v543
    %v545 = vshll.u32 683565275, %v542
    %v546 = vshrl.u32 2475754826, %v543
    %v547 = vor.u32 %v545, %v546
    %v548 = vshll.u32 2475754826, %v542
    %v549 = vshrl.u32 2131351028, %v543
    %v550 = vor.u32 %v548, %v549
    %v551 = vshll.u32 2131351028, %v542
    %v552 = vshrl.u32 2102212464, %v543
    %v553 = vor.u32 %v551, %v552
    %v554 = vshll.u32 2102212464, %v542
    %v555 = vshrl.u32 920167782, %v543
    %v556 = vor.u32 %v554, %v555
    %v557 = vshll.u32 920167782, %v542
    %v558 = vshrl.u32 1326507024, %v543
    %v559 = vor.u32 %v557, %v558
    %vm560 = vcmp.lt.s32.totalorder %v541, 1
    %vm561 = vcmp.lt.s32.totalorder %v541, 2
    %vm562 = vcmp.lt.s32.totalorder %v541, 3
    %vm563 = vcmp.lt.s32.totalorder %v541, 4
    %v564 = vsel %vm560, %v544, %v547
    %v565 = vsel %vm563, %v553, 2102212464
    %v566 = vsel %vm562, %v550, %v565
    %v567 = vsel %vm561, %v564, %v566
    %v568 = vsel %vm560, %v547, %v550
    %v569 = vsel %vm563, %v556, 920167782
    %v570 = vsel %vm562, %v553, %v569
    %v571 = vsel %vm561, %v568, %v570
    %v572 = vsel %vm560, %v550, %v553
    %v573 = vsel %vm563, %v559, 1326507024
    %v574 = vsel %vm562, %v556, %v573
    %v575 = vsel %vm561, %v572, %v574
    %v576 = vshll.u32 %v536, 8
    %v577 = vmul.u32.u64.compose %v576, %v575
    %v578 = vextract.low.u32 %v577
    %v579 = vextract.high.u32 %v577
    %v580 = vmul.u32.u64.compose %v576, %v571
    %v581 = vextract.low.u32 %v580
    %v582 = vextract.high.u32 %v580
    %v583 = vmul.u32 %v576, %v567
    %v584 = vadd.s32 %v579, %v581
    %vm585 = vc.u32 %v579, %v581
    %v586 = vadd.s32 %v582, 1
    %v587 = vsel %vm585, %v586, %v582
    %v588 = vadd.s32 %v583, %v587
    %v589 = vadd.s32 %v588, 536870912
    %v590 = vshrl.u32 %v589, 30
    %v591 = vshll.u32 %v590, 30
    %v592 = vsub.s32 %v588, %v591
    %vm593 = vcmp.lt.s32.totalorder %v592, 0
    %v594 = vsub.s32 0, %v592
    %v595 = vsel %vm593, %v594, %v592
    %v596 = vclz %v595
    %v597 = vsub.s32 %v596, 2
    %vm598 = vcmp.gt.s32.totalorder 0, %v597
    %v599 = vsel %vm598, 0, %v597
    %v600 = vsub.s32 32, %v599
    %v601 = vshll.u32 %v592, %v599
    %v602 = vshrl.u32 %v584, %v600
    %v603 = vor.u32 %v601, %v602
    %v604 = vsub.s32 4294967266, %v599
    %v605 = vadd.s32 %v604, 127
    %v606 = vshll.u32 %v605, 23
    %v607 = vor.u32 4788187, %v606
    %v608 = vand.u32 2147483647, %v607
    %v610 = vcvt.s32.f32 %v603
    %v611 = vmul.f32 %v610, %v608
    %v612 = vxor.u32 %v611, 2147483648
    %v613 = vsel %vm530, %v612, %v611
    %v614 = vsub.s32 4, %v590
    %v615 = vsel %vm530, %v614, %v590
    %v616 = vsel %vm529, %v108, %v613
    %v617 = vsel %vm529, 0, %v615
    %v618 = vcosq.f32.pop %v616
    %v619 = vsinq.f32.pop %v616
    %vm620 = vweird.f32 %v108
    %v621 = vadd.s32 %v617, 3
    %v622 = vand.u32 %v621, 3
    %vm623 = vcmp.lt.s32.totalorder %v622, 2
    %vm624 = vcmp.eq.s32.totalorder %v622, 0
    %v625 = vxor.u32 %v619, 2147483648
    %v626 = vsel %vm624, %v618, %v625
    %vm627 = vcmp.eq.s32.totalorder %v622, 2
    %v628 = vxor.u32 %v618, 2147483648
    %v629 = vsel %vm627, %v628, %v619
    %v630 = vsel %vm623, %v626, %v629
    %v631 = vsel %vm620, nan, %v630
    %v632 = vand.u32 2147483647, %v109
    %vm633 = vcmp.le.f32.partialorder %v632, 0.7853982
    %vm634 = vcmp.lt.s32.totalorder %v109, 0
    %v635 = vand.u32 %v109, 2139095040
    %v636 = vshrl.u32 %v635, 23
    %v637 = vsub.s32 %v636, 127
    %v638 = vand.u32 2147483647, %v109
    %v639 = vand.u32 %v638, 8388607
    %v640 = vor.u32 %v639, 8388608
    %v641 = vsub.s32 0, %v640
    %v642 = vadd.s32 %v637, 1
    %vm643 = vcmp.gt.s32.totalorder %v642, 0
    %v644 = vsel %vm643, %v642, 0
    %v645 = vshrl.u32 %v644, 5
    %v646 = vand.u32 %v644, 31
    %v647 = vsub.s32 32, %v646
    %v648 = vshrl.u32 683565275, %v647
    %v649 = vshll.u32 683565275, %v646
    %v650 = vshrl.u32 2475754826, %v647
    %v651 = vor.u32 %v649, %v650
    %v652 = vshll.u32 2475754826, %v646
    %v653 = vshrl.u32 2131351028, %v647
    %v654 = vor.u32 %v652, %v653
    %v655 = vshll.u32 2131351028, %v646
    %v656 = vshrl.u32 2102212464, %v647
    %v657 = vor.u32 %v655, %v656
    %v658 = vshll.u32 2102212464, %v646
    %v659 = vshrl.u32 920167782, %v647
    %v660 = vor.u32 %v658, %v659
    %v661 = vshll.u32 920167782, %v646
    %v662 = vshrl.u32 1326507024, %v647
    %v663 = vor.u32 %v661, %v662
    %vm664 = vcmp.lt.s32.totalorder %v645, 1
    %vm665 = vcmp.lt.s32.totalorder %v645, 2
    %vm666 = vcmp.lt.s32.totalorder %v645, 3
    %vm667 = vcmp.lt.s32.totalorder %v645, 4
    %v668 = vsel %vm664, %v648, %v651
    %v669 = vsel %vm667, %v657, 2102212464
    %v670 = vsel %vm666, %v654, %v669
    %v671 = vsel %vm665, %v668, %v670
    %v672 = vsel %vm664, %v651, %v654
    %v673 = vsel %vm667, %v660, 920167782
    %v674 = vsel %vm666, %v657, %v673
    %v675 = vsel %vm665, %v672, %v674
    %v676 = vsel %vm664, %v654, %v657
    %v677 = vsel %vm667, %v663, 1326507024
    %v678 = vsel %vm666, %v660, %v677
    %v679 = vsel %vm665, %v676, %v678
    %v680 = vshll.u32 %v640, 8
    %v681 = vmul.u32.u64.compose %v680, %v679
    %v682 = vextract.low.u32 %v681
    %v683 = vextract.high.u32 %v681
    %v684 = vmul.u32.u64.compose %v680, %v675
    %v685 = vextract.low.u32 %v684
    %v686 = vextract.high.u32 %v684
    %v687 = vmul.u32 %v680, %v671
    %v688 = vadd.s32 %v683, %v685
    %vm689 = vc.u32 %v683, %v685
    %v690 = vadd.s32 %v686, 1
    %v691 = vsel %vm689, %v690, %v686
    %v692 = vadd.s32 %v687, %v691
    %v693 = vadd.s32 %v692, 536870912
    %v694 = vshrl.u32 %v693, 30
    %v695 = vshll.u32 %v694, 30
    %v696 = vsub.s32 %v692, %v695
    %vm697 = vcmp.lt.s32.totalorder %v696, 0
    %v698 = vsub.s32 0, %v696
    %v699 = vsel %vm697, %v698, %v696
    %v700 = vclz %v699
    %v701 = vsub.s32 %v700, 2
    %vm702 = vcmp.gt.s32.totalorder 0, %v701
    %v703 = vsel %vm702, 0, %v701
    %v704 = vsub.s32 32, %v703
    %v705 = vshll.u32 %v696, %v703
    %v706 = vshrl.u32 %v688, %v704
    %v707 = vor.u32 %v705, %v706
    %v708 = vsub.s32 4294967266, %v703
    %v709 = vadd.s32 %v708, 127
    %v710 = vshll.u32 %v709, 23
    %v711 = vor.u32 4788187, %v710
    %v712 = vand.u32 2147483647, %v711
    %v714 = vcvt.s32.f32 %v707
    %v715 = vmul.f32 %v714, %v712
    %v716 = vxor.u32 %v715, 2147483648
    %v717 = vsel %vm634, %v716, %v715
    %v718 = vsub.s32 4, %v694
    %v719 = vsel %vm634, %v718, %v694
    %v720 = vsel %vm633, %v109, %v717
    %v721 = vsel %vm633, 0, %v719
    %v722 = vcosq.f32.pop %v720
    %v723 = vsinq.f32.pop %v720
    %vm724 = vweird.f32 %v109
    %v725 = vadd.s32 %v721, 3
    %v726 = vand.u32 %v725, 3
    %vm727 = vcmp.lt.s32.totalorder %v726, 2
    %vm728 = vcmp.eq.s32.totalorder %v726, 0
    %v729 = vxor.u32 %v723, 2147483648
    %v730 = vsel %vm728, %v722, %v729
    %vm731 = vcmp.eq.s32.totalorder %v726, 2
    %v732 = vxor.u32 %v722, 2147483648
    %v733 = vsel %vm731, %v732, %v723
    %v734 = vsel %vm727, %v730, %v733
    %v735 = vsel %vm724, nan, %v734
    %v736 = vand.u32 2147483647, %v110
    %vm737 = vcmp.le.f32.partialorder %v736, 0.7853982
    %vm738 = vcmp.lt.s32.totalorder %v110, 0
    %v739 = vand.u32 %v110, 2139095040
    %v740 = vshrl.u32 %v739, 23
    %v741 = vsub.s32 %v740, 127
    %v742 = vand.u32 2147483647, %v110
    %v743 = vand.u32 %v742, 8388607
    %v744 = vor.u32 %v743, 8388608
    %v745 = vsub.s32 0, %v744
    %v746 = vadd.s32 %v741, 1
    %vm747 = vcmp.gt.s32.totalorder %v746, 0
    %v748 = vsel %vm747, %v746, 0
    %v749 = vshrl.u32 %v748, 5
    %v750 = vand.u32 %v748, 31
    %v751 = vsub.s32 32, %v750
    %v752 = vshrl.u32 683565275, %v751
    %v753 = vshll.u32 683565275, %v750
    %v754 = vshrl.u32 2475754826, %v751
    %v755 = vor.u32 %v753, %v754
    %v756 = vshll.u32 2475754826, %v750
    %v757 = vshrl.u32 2131351028, %v751
    %v758 = vor.u32 %v756, %v757
    %v759 = vshll.u32 2131351028, %v750
    %v760 = vshrl.u32 2102212464, %v751
    %v761 = vor.u32 %v759, %v760
    %v762 = vshll.u32 2102212464, %v750
    %v763 = vshrl.u32 920167782, %v751
    %v764 = vor.u32 %v762, %v763
    %v765 = vshll.u32 920167782, %v750
    %v766 = vshrl.u32 1326507024, %v751
    %v767 = vor.u32 %v765, %v766
    %vm768 = vcmp.lt.s32.totalorder %v749, 1
    %vm769 = vcmp.lt.s32.totalorder %v749, 2
    %vm770 = vcmp.lt.s32.totalorder %v749, 3
    %vm771 = vcmp.lt.s32.totalorder %v749, 4
    %v772 = vsel %vm768, %v752, %v755
    %v773 = vsel %vm771, %v761, 2102212464
    %v774 = vsel %vm770, %v758, %v773
    %v775 = vsel %vm769, %v772, %v774
    %v776 = vsel %vm768, %v755, %v758
    %v777 = vsel %vm771, %v764, 920167782
    %v778 = vsel %vm770, %v761, %v777
    %v779 = vsel %vm769, %v776, %v778
    %v780 = vsel %vm768, %v758, %v761
    %v781 = vsel %vm771, %v767, 1326507024
    %v782 = vsel %vm770, %v764, %v781
    %v783 = vsel %vm769, %v780, %v782
    %v784 = vshll.u32 %v744, 8
    %v785 = vmul.u32.u64.compose %v784, %v783
    %v786 = vextract.low.u32 %v785
    %v787 = vextract.high.u32 %v785
    %v788 = vmul.u32.u64.compose %v784, %v779
    %v789 = vextract.low.u32 %v788
    %v790 = vextract.high.u32 %v788
    %v791 = vmul.u32 %v784, %v775
    %v792 = vadd.s32 %v787, %v789
    %vm793 = vc.u32 %v787, %v789
    %v794 = vadd.s32 %v790, 1
    %v795 = vsel %vm793, %v794, %v790
    %v796 = vadd.s32 %v791, %v795
    %v797 = vadd.s32 %v796, 536870912
    %v798 = vshrl.u32 %v797, 30
    %v799 = vshll.u32 %v798, 30
    %v800 = vsub.s32 %v796, %v799
    %vm801 = vcmp.lt.s32.totalorder %v800, 0
    %v802 = vsub.s32 0, %v800
    %v803 = vsel %vm801, %v802, %v800
    %v804 = vclz %v803
    %v805 = vsub.s32 %v804, 2
    %vm806 = vcmp.gt.s32.totalorder 0, %v805
    %v807 = vsel %vm806, 0, %v805
    %v808 = vsub.s32 32, %v807
    %v809 = vshll.u32 %v800, %v807
    %v810 = vshrl.u32 %v792, %v808
    %v811 = vor.u32 %v809, %v810
    %v812 = vsub.s32 4294967266, %v807
    %v813 = vadd.s32 %v812, 127
    %v814 = vshll.u32 %v813, 23
    %v815 = vor.u32 4788187, %v814
    %v816 = vand.u32 2147483647, %v815
    %v818 = vcvt.s32.f32 %v811
    %v819 = vmul.f32 %v818, %v816
    %v820 = vxor.u32 %v819, 2147483648
    %v821 = vsel %vm738, %v820, %v819
    %v822 = vsub.s32 4, %v798
    %v823 = vsel %vm738, %v822, %v798
    %v824 = vsel %vm737, %v110, %v821
    %v825 = vsel %vm737, 0, %v823
    %v826 = vcosq.f32.pop %v824
    %v827 = vsinq.f32.pop %v824
    %vm828 = vweird.f32 %v110
    %v829 = vadd.s32 %v825, 3
    %v830 = vand.u32 %v829, 3
    %vm831 = vcmp.lt.s32.totalorder %v830, 2
    %vm832 = vcmp.eq.s32.totalorder %v830, 0
    %v833 = vxor.u32 %v827, 2147483648
    %v834 = vsel %vm832, %v826, %v833
    %vm835 = vcmp.eq.s32.totalorder %v830, 2
    %v836 = vxor.u32 %v826, 2147483648
    %v837 = vsel %vm835, %v836, %v827
    %v838 = vsel %vm831, %v834, %v837
    %v839 = vsel %vm828, nan, %v838
    %v840 = vand.u32 2147483647, %v111
    %vm841 = vcmp.le.f32.partialorder %v840, 0.7853982
    %vm842 = vcmp.lt.s32.totalorder %v111, 0
    %v843 = vand.u32 %v111, 2139095040
    %v844 = vshrl.u32 %v843, 23
    %v845 = vsub.s32 %v844, 127
    %v846 = vand.u32 2147483647, %v111
    %v847 = vand.u32 %v846, 8388607
    %v848 = vor.u32 %v847, 8388608
    %v849 = vsub.s32 0, %v848
    %v850 = vadd.s32 %v845, 1
    %vm851 = vcmp.gt.s32.totalorder %v850, 0
    %v852 = vsel %vm851, %v850, 0
    %v853 = vshrl.u32 %v852, 5
    %v854 = vand.u32 %v852, 31
    %v855 = vsub.s32 32, %v854
    %v856 = vshrl.u32 683565275, %v855
    %v857 = vshll.u32 683565275, %v854
    %v858 = vshrl.u32 2475754826, %v855
    %v859 = vor.u32 %v857, %v858
    %v860 = vshll.u32 2475754826, %v854
    %v861 = vshrl.u32 2131351028, %v855
    %v862 = vor.u32 %v860, %v861
    %v863 = vshll.u32 2131351028, %v854
    %v864 = vshrl.u32 2102212464, %v855
    %v865 = vor.u32 %v863, %v864
    %v866 = vshll.u32 2102212464, %v854
    %v867 = vshrl.u32 920167782, %v855
    %v868 = vor.u32 %v866, %v867
    %v869 = vshll.u32 920167782, %v854
    %v870 = vshrl.u32 1326507024, %v855
    %v871 = vor.u32 %v869, %v870
    %vm872 = vcmp.lt.s32.totalorder %v853, 1
    %vm873 = vcmp.lt.s32.totalorder %v853, 2
    %vm874 = vcmp.lt.s32.totalorder %v853, 3
    %vm875 = vcmp.lt.s32.totalorder %v853, 4
    %v876 = vsel %vm872, %v856, %v859
    %v877 = vsel %vm875, %v865, 2102212464
    %v878 = vsel %vm874, %v862, %v877
    %v879 = vsel %vm873, %v876, %v878
    %v880 = vsel %vm872, %v859, %v862
    %v881 = vsel %vm875, %v868, 920167782
    %v882 = vsel %vm874, %v865, %v881
    %v883 = vsel %vm873, %v880, %v882
    %v884 = vsel %vm872, %v862, %v865
    %v885 = vsel %vm875, %v871, 1326507024
    %v886 = vsel %vm874, %v868, %v885
    %v887 = vsel %vm873, %v884, %v886
    %v888 = vshll.u32 %v848, 8
    %v889 = vmul.u32.u64.compose %v888, %v887
    %v890 = vextract.low.u32 %v889
    %v891 = vextract.high.u32 %v889
    %v892 = vmul.u32.u64.compose %v888, %v883
    %v893 = vextract.low.u32 %v892
    %v894 = vextract.high.u32 %v892
    %v895 = vmul.u32 %v888, %v879
    %v896 = vadd.s32 %v891, %v893
    %vm897 = vc.u32 %v891, %v893
    %v898 = vadd.s32 %v894, 1
    %v899 = vsel %vm897, %v898, %v894
    %v900 = vadd.s32 %v895, %v899
    %v901 = vadd.s32 %v900, 536870912
    %v902 = vshrl.u32 %v901, 30
    %v903 = vshll.u32 %v902, 30
    %v904 = vsub.s32 %v900, %v903
    %vm905 = vcmp.lt.s32.totalorder %v904, 0
    %v906 = vsub.s32 0, %v904
    %v907 = vsel %vm905, %v906, %v904
    %v908 = vclz %v907
    %v909 = vsub.s32 %v908, 2
    %vm910 = vcmp.gt.s32.totalorder 0, %v909
    %v911 = vsel %vm910, 0, %v909
    %v912 = vsub.s32 32, %v911
    %v913 = vshll.u32 %v904, %v911
    %v914 = vshrl.u32 %v896, %v912
    %v915 = vor.u32 %v913, %v914
    %v916 = vsub.s32 4294967266, %v911
    %v917 = vadd.s32 %v916, 127
    %v918 = vshll.u32 %v917, 23
    %v919 = vor.u32 4788187, %v918
    %v920 = vand.u32 2147483647, %v919
    %v922 = vcvt.s32.f32 %v915
    %v923 = vmul.f32 %v922, %v920
    %v924 = vxor.u32 %v923, 2147483648
    %v925 = vsel %vm842, %v924, %v923
    %v926 = vsub.s32 4, %v902
    %v927 = vsel %vm842, %v926, %v902
    %v928 = vsel %vm841, %v111, %v925
    %v929 = vsel %vm841, 0, %v927
    %v930 = vcosq.f32.pop %v928
    %v931 = vsinq.f32.pop %v928
    %vm932 = vweird.f32 %v111
    %v933 = vadd.s32 %v929, 3
    %v934 = vand.u32 %v933, 3
    %vm935 = vcmp.lt.s32.totalorder %v934, 2
    %vm936 = vcmp.eq.s32.totalorder %v934, 0
    %v937 = vxor.u32 %v931, 2147483648
    %v938 = vsel %vm936, %v930, %v937
    %vm939 = vcmp.eq.s32.totalorder %v934, 2
    %v940 = vxor.u32 %v930, 2147483648
    %v941 = vsel %vm939, %v940, %v931
    %v942 = vsel %vm935, %v938, %v941
    %v943 = vsel %vm932, nan, %v942
    %v944 = vand.u32 2147483647, %v104
    %vm945 = vcmp.le.f32.partialorder %v944, 0.7853982
    %vm946 = vcmp.lt.s32.totalorder %v104, 0
    %v947 = vand.u32 %v104, 2139095040
    %v948 = vshrl.u32 %v947, 23
    %v949 = vsub.s32 %v948, 127
    %v950 = vand.u32 2147483647, %v104
    %v951 = vand.u32 %v950, 8388607
    %v952 = vor.u32 %v951, 8388608
    %v953 = vsub.s32 0, %v952
    %v954 = vadd.s32 %v949, 1
    %vm955 = vcmp.gt.s32.totalorder %v954, 0
    %v956 = vsel %vm955, %v954, 0
    %v957 = vshrl.u32 %v956, 5
    %v958 = vand.u32 %v956, 31
    %v959 = vsub.s32 32, %v958
    %v960 = vshrl.u32 683565275, %v959
    %v961 = vshll.u32 683565275, %v958
    %v962 = vshrl.u32 2475754826, %v959
    %v963 = vor.u32 %v961, %v962
    %v964 = vshll.u32 2475754826, %v958
    %v965 = vshrl.u32 2131351028, %v959
    %v966 = vor.u32 %v964, %v965
    %v967 = vshll.u32 2131351028, %v958
    %v968 = vshrl.u32 2102212464, %v959
    %v969 = vor.u32 %v967, %v968
    %v970 = vshll.u32 2102212464, %v958
    %v971 = vshrl.u32 920167782, %v959
    %v972 = vor.u32 %v970, %v971
    %v973 = vshll.u32 920167782, %v958
    %v974 = vshrl.u32 1326507024, %v959
    %v975 = vor.u32 %v973, %v974
    %vm976 = vcmp.lt.s32.totalorder %v957, 1
    %vm977 = vcmp.lt.s32.totalorder %v957, 2
    %vm978 = vcmp.lt.s32.totalorder %v957, 3
    %vm979 = vcmp.lt.s32.totalorder %v957, 4
    %v980 = vsel %vm976, %v960, %v963
    %v981 = vsel %vm979, %v969, 2102212464
    %v982 = vsel %vm978, %v966, %v981
    %v983 = vsel %vm977, %v980, %v982
    %v984 = vsel %vm976, %v963, %v966
    %v985 = vsel %vm979, %v972, 920167782
    %v986 = vsel %vm978, %v969, %v985
    %v987 = vsel %vm977, %v984, %v986
    %v988 = vsel %vm976, %v966, %v969
    %v989 = vsel %vm979, %v975, 1326507024
    %v990 = vsel %vm978, %v972, %v989
    %v991 = vsel %vm977, %v988, %v990
    %v992 = vshll.u32 %v952, 8
    %v993 = vmul.u32.u64.compose %v992, %v991
    %v994 = vextract.low.u32 %v993
    %v995 = vextract.high.u32 %v993
    %v996 = vmul.u32.u64.compose %v992, %v987
    %v997 = vextract.low.u32 %v996
    %v998 = vextract.high.u32 %v996
    %v999 = vmul.u32 %v992, %v983
    %v1000 = vadd.s32 %v995, %v997
    %vm1001 = vc.u32 %v995, %v997
    %v1002 = vadd.s32 %v998, 1
    %v1003 = vsel %vm1001, %v1002, %v998
    %v1004 = vadd.s32 %v999, %v1003
    %v1005 = vadd.s32 %v1004, 536870912
    %v1006 = vshrl.u32 %v1005, 30
    %v1007 = vshll.u32 %v1006, 30
    %v1008 = vsub.s32 %v1004, %v1007
    %vm1009 = vcmp.lt.s32.totalorder %v1008, 0
    %v1010 = vsub.s32 0, %v1008
    %v1011 = vsel %vm1009, %v1010, %v1008
    %v1012 = vclz %v1011
    %v1013 = vsub.s32 %v1012, 2
    %vm1014 = vcmp.gt.s32.totalorder 0, %v1013
    %v1015 = vsel %vm1014, 0, %v1013
    %v1016 = vsub.s32 32, %v1015
    %v1017 = vshll.u32 %v1008, %v1015
    %v1018 = vshrl.u32 %v1000, %v1016
    %v1019 = vor.u32 %v1017, %v1018
    %v1020 = vsub.s32 4294967266, %v1015
    %v1021 = vadd.s32 %v1020, 127
    %v1022 = vshll.u32 %v1021, 23
    %v1023 = vor.u32 4788187, %v1022
    %v1024 = vand.u32 2147483647, %v1023
    %v1026 = vcvt.s32.f32 %v1019
    %v1027 = vmul.f32 %v1026, %v1024
    %v1028 = vxor.u32 %v1027, 2147483648
    %v1029 = vsel %vm946, %v1028, %v1027
    %v1030 = vsub.s32 4, %v1006
    %v1031 = vsel %vm946, %v1030, %v1006
    %v1032 = vsel %vm945, %v104, %v1029
    %v1033 = vsel %vm945, 0, %v1031
    %v1034 = vcosq.f32.pop %v1032
    %v1035 = vsinq.f32.pop %v1032
    %vm1036 = vweird.f32 %v104
    %v1037 = vand.u32 %v1033, 3
    %vm1038 = vcmp.lt.s32.totalorder %v1037, 2
    %vm1039 = vcmp.eq.s32.totalorder %v1037, 0
    %v1040 = vxor.u32 %v1035, 2147483648
    %v1041 = vsel %vm1039, %v1034, %v1040
    %vm1042 = vcmp.eq.s32.totalorder %v1037, 2
    %v1043 = vxor.u32 %v1034, 2147483648
    %v1044 = vsel %vm1042, %v1043, %v1035
    %v1045 = vsel %vm1038, %v1041, %v1044
    %v1046 = vsel %vm1036, nan, %v1045
    %v1047 = vand.u32 2147483647, %v105
    %vm1048 = vcmp.le.f32.partialorder %v1047, 0.7853982
    %vm1049 = vcmp.lt.s32.totalorder %v105, 0
    %v1050 = vand.u32 %v105, 2139095040
    %v1051 = vshrl.u32 %v1050, 23
    %v1052 = vsub.s32 %v1051, 127
    %v1053 = vand.u32 2147483647, %v105
    %v1054 = vand.u32 %v1053, 8388607
    %v1055 = vor.u32 %v1054, 8388608
    %v1056 = vsub.s32 0, %v1055
    %v1057 = vadd.s32 %v1052, 1
    %vm1058 = vcmp.gt.s32.totalorder %v1057, 0
    %v1059 = vsel %vm1058, %v1057, 0
    %v1060 = vshrl.u32 %v1059, 5
    %v1061 = vand.u32 %v1059, 31
    %v1062 = vsub.s32 32, %v1061
    %v1063 = vshrl.u32 683565275, %v1062
    %v1064 = vshll.u32 683565275, %v1061
    %v1065 = vshrl.u32 2475754826, %v1062
    %v1066 = vor.u32 %v1064, %v1065
    %v1067 = vshll.u32 2475754826, %v1061
    %v1068 = vshrl.u32 2131351028, %v1062
    %v1069 = vor.u32 %v1067, %v1068
    %v1070 = vshll.u32 2131351028, %v1061
    %v1071 = vshrl.u32 2102212464, %v1062
    %v1072 = vor.u32 %v1070, %v1071
    %v1073 = vshll.u32 2102212464, %v1061
    %v1074 = vshrl.u32 920167782, %v1062
    %v1075 = vor.u32 %v1073, %v1074
    %v1076 = vshll.u32 920167782, %v1061
    %v1077 = vshrl.u32 1326507024, %v1062
    %v1078 = vor.u32 %v1076, %v1077
    %vm1079 = vcmp.lt.s32.totalorder %v1060, 1
    %vm1080 = vcmp.lt.s32.totalorder %v1060, 2
    %vm1081 = vcmp.lt.s32.totalorder %v1060, 3
    %vm1082 = vcmp.lt.s32.totalorder %v1060, 4
    %v1083 = vsel %vm1079, %v1063, %v1066
    %v1084 = vsel %vm1082, %v1072, 2102212464
    %v1085 = vsel %vm1081, %v1069, %v1084
    %v1086 = vsel %vm1080, %v1083, %v1085
    %v1087 = vsel %vm1079, %v1066, %v1069
    %v1088 = vsel %vm1082, %v1075, 920167782
    %v1089 = vsel %vm1081, %v1072, %v1088
    %v1090 = vsel %vm1080, %v1087, %v1089
    %v1091 = vsel %vm1079, %v1069, %v1072
    %v1092 = vsel %vm1082, %v1078, 1326507024
    %v1093 = vsel %vm1081, %v1075, %v1092
    %v1094 = vsel %vm1080, %v1091, %v1093
    %v1095 = vshll.u32 %v1055, 8
    %v1096 = vmul.u32.u64.compose %v1095, %v1094
    %v1097 = vextract.low.u32 %v1096
    %v1098 = vextract.high.u32 %v1096
    %v1099 = vmul.u32.u64.compose %v1095, %v1090
    %v1100 = vextract.low.u32 %v1099
    %v1101 = vextract.high.u32 %v1099
    %v1102 = vmul.u32 %v1095, %v1086
    %v1103 = vadd.s32 %v1098, %v1100
    %vm1104 = vc.u32 %v1098, %v1100
    %v1105 = vadd.s32 %v1101, 1
    %v1106 = vsel %vm1104, %v1105, %v1101
    %v1107 = vadd.s32 %v1102, %v1106
    %v1108 = vadd.s32 %v1107, 536870912
    %v1109 = vshrl.u32 %v1108, 30
    %v1110 = vshll.u32 %v1109, 30
    %v1111 = vsub.s32 %v1107, %v1110
    %vm1112 = vcmp.lt.s32.totalorder %v1111, 0
    %v1113 = vsub.s32 0, %v1111
    %v1114 = vsel %vm1112, %v1113, %v1111
    %v1115 = vclz %v1114
    %v1116 = vsub.s32 %v1115, 2
    %vm1117 = vcmp.gt.s32.totalorder 0, %v1116
    %v1118 = vsel %vm1117, 0, %v1116
    %v1119 = vsub.s32 32, %v1118
    %v1120 = vshll.u32 %v1111, %v1118
    %v1121 = vshrl.u32 %v1103, %v1119
    %v1122 = vor.u32 %v1120, %v1121
    %v1123 = vsub.s32 4294967266, %v1118
    %v1124 = vadd.s32 %v1123, 127
    %v1125 = vshll.u32 %v1124, 23
    %v1126 = vor.u32 4788187, %v1125
    %v1127 = vand.u32 2147483647, %v1126
    %v1129 = vcvt.s32.f32 %v1122
    %v1130 = vmul.f32 %v1129, %v1127
    %v1131 = vxor.u32 %v1130, 2147483648
    %v1132 = vsel %vm1049, %v1131, %v1130
    %v1133 = vsub.s32 4, %v1109
    %v1134 = vsel %vm1049, %v1133, %v1109
    %v1135 = vsel %vm1048, %v105, %v1132
    %v1136 = vsel %vm1048, 0, %v1134
    %v1137 = vcosq.f32.pop %v1135
    %v1138 = vsinq.f32.pop %v1135
    %vm1139 = vweird.f32 %v105
    %v1140 = vand.u32 %v1136, 3
    %vm1141 = vcmp.lt.s32.totalorder %v1140, 2
    %vm1142 = vcmp.eq.s32.totalorder %v1140, 0
    %v1143 = vxor.u32 %v1138, 2147483648
    %v1144 = vsel %vm1142, %v1137, %v1143
    %vm1145 = vcmp.eq.s32.totalorder %v1140, 2
    %v1146 = vxor.u32 %v1137, 2147483648
    %v1147 = vsel %vm1145, %v1146, %v1138
    %v1148 = vsel %vm1141, %v1144, %v1147
    %v1149 = vsel %vm1139, nan, %v1148
    %v1150 = vand.u32 2147483647, %v106
    %vm1151 = vcmp.le.f32.partialorder %v1150, 0.7853982
    %vm1152 = vcmp.lt.s32.totalorder %v106, 0
    %v1153 = vand.u32 %v106, 2139095040
    %v1154 = vshrl.u32 %v1153, 23
    %v1155 = vsub.s32 %v1154, 127
    %v1156 = vand.u32 2147483647, %v106
    %v1157 = vand.u32 %v1156, 8388607
    %v1158 = vor.u32 %v1157, 8388608
    %v1159 = vsub.s32 0, %v1158
    %v1160 = vadd.s32 %v1155, 1
    %vm1161 = vcmp.gt.s32.totalorder %v1160, 0
    %v1162 = vsel %vm1161, %v1160, 0
    %v1163 = vshrl.u32 %v1162, 5
    %v1164 = vand.u32 %v1162, 31
    %v1165 = vsub.s32 32, %v1164
    %v1166 = vshrl.u32 683565275, %v1165
    %v1167 = vshll.u32 683565275, %v1164
    %v1168 = vshrl.u32 2475754826, %v1165
    %v1169 = vor.u32 %v1167, %v1168
    %v1170 = vshll.u32 2475754826, %v1164
    %v1171 = vshrl.u32 2131351028, %v1165
    %v1172 = vor.u32 %v1170, %v1171
    %v1173 = vshll.u32 2131351028, %v1164
    %v1174 = vshrl.u32 2102212464, %v1165
    %v1175 = vor.u32 %v1173, %v1174
    %v1176 = vshll.u32 2102212464, %v1164
    %v1177 = vshrl.u32 920167782, %v1165
    %v1178 = vor.u32 %v1176, %v1177
    %v1179 = vshll.u32 920167782, %v1164
    %v1180 = vshrl.u32 1326507024, %v1165
    %v1181 = vor.u32 %v1179, %v1180
    %vm1182 = vcmp.lt.s32.totalorder %v1163, 1
    %vm1183 = vcmp.lt.s32.totalorder %v1163, 2
    %vm1184 = vcmp.lt.s32.totalorder %v1163, 3
    %vm1185 = vcmp.lt.s32.totalorder %v1163, 4
    %v1186 = vsel %vm1182, %v1166, %v1169
    %v1187 = vsel %vm1185, %v1175, 2102212464
    %v1188 = vsel %vm1184, %v1172, %v1187
    %v1189 = vsel %vm1183, %v1186, %v1188
    %v1190 = vsel %vm1182, %v1169, %v1172
    %v1191 = vsel %vm1185, %v1178, 920167782
    %v1192 = vsel %vm1184, %v1175, %v1191
    %v1193 = vsel %vm1183, %v1190, %v1192
    %v1194 = vsel %vm1182, %v1172, %v1175
    %v1195 = vsel %vm1185, %v1181, 1326507024
    %v1196 = vsel %vm1184, %v1178, %v1195
    %v1197 = vsel %vm1183, %v1194, %v1196
    %v1198 = vshll.u32 %v1158, 8
    %v1199 = vmul.u32.u64.compose %v1198, %v1197
    %v1200 = vextract.low.u32 %v1199
    %v1201 = vextract.high.u32 %v1199
    %v1202 = vmul.u32.u64.compose %v1198, %v1193
    %v1203 = vextract.low.u32 %v1202
    %v1204 = vextract.high.u32 %v1202
    %v1205 = vmul.u32 %v1198, %v1189
    %v1206 = vadd.s32 %v1201, %v1203
    %vm1207 = vc.u32 %v1201, %v1203
    %v1208 = vadd.s32 %v1204, 1
    %v1209 = vsel %vm1207, %v1208, %v1204
    %v1210 = vadd.s32 %v1205, %v1209
    %v1211 = vadd.s32 %v1210, 536870912
    %v1212 = vshrl.u32 %v1211, 30
    %v1213 = vshll.u32 %v1212, 30
    %v1214 = vsub.s32 %v1210, %v1213
    %vm1215 = vcmp.lt.s32.totalorder %v1214, 0
    %v1216 = vsub.s32 0, %v1214
    %v1217 = vsel %vm1215, %v1216, %v1214
    %v1218 = vclz %v1217
    %v1219 = vsub.s32 %v1218, 2
    %vm1220 = vcmp.gt.s32.totalorder 0, %v1219
    %v1221 = vsel %vm1220, 0, %v1219
    %v1222 = vsub.s32 32, %v1221
    %v1223 = vshll.u32 %v1214, %v1221
    %v1224 = vshrl.u32 %v1206, %v1222
    %v1225 = vor.u32 %v1223, %v1224
    %v1226 = vsub.s32 4294967266, %v1221
    %v1227 = vadd.s32 %v1226, 127
    %v1228 = vshll.u32 %v1227, 23
    %v1229 = vor.u32 4788187, %v1228
    %v1230 = vand.u32 2147483647, %v1229
    %v1232 = vcvt.s32.f32 %v1225
    %v1233 = vmul.f32 %v1232, %v1230
    %v1234 = vxor.u32 %v1233, 2147483648
    %v1235 = vsel %vm1152, %v1234, %v1233
    %v1236 = vsub.s32 4, %v1212
    %v1237 = vsel %vm1152, %v1236, %v1212
    %v1238 = vsel %vm1151, %v106, %v1235
    %v1239 = vsel %vm1151, 0, %v1237
    %v1240 = vcosq.f32.pop %v1238
    %v1241 = vsinq.f32.pop %v1238
    %vm1242 = vweird.f32 %v106
    %v1243 = vand.u32 %v1239, 3
    %vm1244 = vcmp.lt.s32.totalorder %v1243, 2
    %vm1245 = vcmp.eq.s32.totalorder %v1243, 0
    %v1246 = vxor.u32 %v1241, 2147483648
    %v1247 = vsel %vm1245, %v1240, %v1246
    %vm1248 = vcmp.eq.s32.totalorder %v1243, 2
    %v1249 = vxor.u32 %v1240, 2147483648
    %v1250 = vsel %vm1248, %v1249, %v1241
    %v1251 = vsel %vm1244, %v1247, %v1250
    %v1252 = vsel %vm1242, nan, %v1251
    %v1253 = vand.u32 2147483647, %v107
    %vm1254 = vcmp.le.f32.partialorder %v1253, 0.7853982
    %vm1255 = vcmp.lt.s32.totalorder %v107, 0
    %v1256 = vand.u32 %v107, 2139095040
    %v1257 = vshrl.u32 %v1256, 23
    %v1258 = vsub.s32 %v1257, 127
    %v1259 = vand.u32 2147483647, %v107
    %v1260 = vand.u32 %v1259, 8388607
    %v1261 = vor.u32 %v1260, 8388608
    %v1262 = vsub.s32 0, %v1261
    %v1263 = vadd.s32 %v1258, 1
    %vm1264 = vcmp.gt.s32.totalorder %v1263, 0
    %v1265 = vsel %vm1264, %v1263, 0
    %v1266 = vshrl.u32 %v1265, 5
    %v1267 = vand.u32 %v1265, 31
    %v1268 = vsub.s32 32, %v1267
    %v1269 = vshrl.u32 683565275, %v1268
    %v1270 = vshll.u32 683565275, %v1267
    %v1271 = vshrl.u32 2475754826, %v1268
    %v1272 = vor.u32 %v1270, %v1271
    %v1273 = vshll.u32 2475754826, %v1267
    %v1274 = vshrl.u32 2131351028, %v1268
    %v1275 = vor.u32 %v1273, %v1274
    %v1276 = vshll.u32 2131351028, %v1267
    %v1277 = vshrl.u32 2102212464, %v1268
    %v1278 = vor.u32 %v1276, %v1277
    %v1279 = vshll.u32 2102212464, %v1267
    %v1280 = vshrl.u32 920167782, %v1268
    %v1281 = vor.u32 %v1279, %v1280
    %v1282 = vshll.u32 920167782, %v1267
    %v1283 = vshrl.u32 1326507024, %v1268
    %v1284 = vor.u32 %v1282, %v1283
    %vm1285 = vcmp.lt.s32.totalorder %v1266, 1
    %vm1286 = vcmp.lt.s32.totalorder %v1266, 2
    %vm1287 = vcmp.lt.s32.totalorder %v1266, 3
    %vm1288 = vcmp.lt.s32.totalorder %v1266, 4
    %v1289 = vsel %vm1285, %v1269, %v1272
    %v1290 = vsel %vm1288, %v1278, 2102212464
    %v1291 = vsel %vm1287, %v1275, %v1290
    %v1292 = vsel %vm1286, %v1289, %v1291
    %v1293 = vsel %vm1285, %v1272, %v1275
    %v1294 = vsel %vm1288, %v1281, 920167782
    %v1295 = vsel %vm1287, %v1278, %v1294
    %v1296 = vsel %vm1286, %v1293, %v1295
    %v1297 = vsel %vm1285, %v1275, %v1278
    %v1298 = vsel %vm1288, %v1284, 1326507024
    %v1299 = vsel %vm1287, %v1281, %v1298
    %v1300 = vsel %vm1286, %v1297, %v1299
    %v1301 = vshll.u32 %v1261, 8
    %v1302 = vmul.u32.u64.compose %v1301, %v1300
    %v1303 = vextract.low.u32 %v1302
    %v1304 = vextract.high.u32 %v1302
    %v1305 = vmul.u32.u64.compose %v1301, %v1296
    %v1306 = vextract.low.u32 %v1305
    %v1307 = vextract.high.u32 %v1305
    %v1308 = vmul.u32 %v1301, %v1292
    %v1309 = vadd.s32 %v1304, %v1306
    %vm1310 = vc.u32 %v1304, %v1306
    %v1311 = vadd.s32 %v1307, 1
    %v1312 = vsel %vm1310, %v1311, %v1307
    %v1313 = vadd.s32 %v1308, %v1312
    %v1314 = vadd.s32 %v1313, 536870912
    %v1315 = vshrl.u32 %v1314, 30
    %v1316 = vshll.u32 %v1315, 30
    %v1317 = vsub.s32 %v1313, %v1316
    %vm1318 = vcmp.lt.s32.totalorder %v1317, 0
    %v1319 = vsub.s32 0, %v1317
    %v1320 = vsel %vm1318, %v1319, %v1317
    %v1321 = vclz %v1320
    %v1322 = vsub.s32 %v1321, 2
    %vm1323 = vcmp.gt.s32.totalorder 0, %v1322
    %v1324 = vsel %vm1323, 0, %v1322
    %v1325 = vsub.s32 32, %v1324
    %v1326 = vshll.u32 %v1317, %v1324
    %v1327 = vshrl.u32 %v1309, %v1325
    %v1328 = vor.u32 %v1326, %v1327
    %v1329 = vsub.s32 4294967266, %v1324
    %v1330 = vadd.s32 %v1329, 127
    %v1331 = vshll.u32 %v1330, 23
    %v1332 = vor.u32 4788187, %v1331
    %v1333 = vand.u32 2147483647, %v1332
    %v1335 = vcvt.s32.f32 %v1328
    %v1336 = vmul.f32 %v1335, %v1333
    %v1337 = vxor.u32 %v1336, 2147483648
    %v1338 = vsel %vm1255, %v1337, %v1336
    %v1339 = vsub.s32 4, %v1315
    %v1340 = vsel %vm1255, %v1339, %v1315
    %v1341 = vsel %vm1254, %v107, %v1338
    %v1342 = vsel %vm1254, 0, %v1340
    %v1343 = vcosq.f32.pop %v1341
    %v1344 = vsinq.f32.pop %v1341
    %vm1345 = vweird.f32 %v107
    %v1346 = vand.u32 %v1342, 3
    %vm1347 = vcmp.lt.s32.totalorder %v1346, 2
    %vm1348 = vcmp.eq.s32.totalorder %v1346, 0
    %v1349 = vxor.u32 %v1344, 2147483648
    %v1350 = vsel %vm1348, %v1343, %v1349
    %vm1351 = vcmp.eq.s32.totalorder %v1346, 2
    %v1352 = vxor.u32 %v1343, 2147483648
    %v1353 = vsel %vm1351, %v1352, %v1344
    %v1354 = vsel %vm1347, %v1350, %v1353
    %v1355 = vsel %vm1345, nan, %v1354
    %v1356 = vand.u32 2147483647, %v108
    %vm1357 = vcmp.le.f32.partialorder %v1356, 0.7853982
    %vm1358 = vcmp.lt.s32.totalorder %v108, 0
    %v1359 = vand.u32 %v108, 2139095040
    %v1360 = vshrl.u32 %v1359, 23
    %v1361 = vsub.s32 %v1360, 127
    %v1362 = vand.u32 2147483647, %v108
    %v1363 = vand.u32 %v1362, 8388607
    %v1364 = vor.u32 %v1363, 8388608
    %v1365 = vsub.s32 0, %v1364
    %v1366 = vadd.s32 %v1361, 1
    %vm1367 = vcmp.gt.s32.totalorder %v1366, 0
    %v1368 = vsel %vm1367, %v1366, 0
    %v1369 = vshrl.u32 %v1368, 5
    %v1370 = vand.u32 %v1368, 31
    %v1371 = vsub.s32 32, %v1370
    %v1372 = vshrl.u32 683565275, %v1371
    %v1373 = vshll.u32 683565275, %v1370
    %v1374 = vshrl.u32 2475754826, %v1371
    %v1375 = vor.u32 %v1373, %v1374
    %v1376 = vshll.u32 2475754826, %v1370
    %v1377 = vshrl.u32 2131351028, %v1371
    %v1378 = vor.u32 %v1376, %v1377
    %v1379 = vshll.u32 2131351028, %v1370
    %v1380 = vshrl.u32 2102212464, %v1371
    %v1381 = vor.u32 %v1379, %v1380
    %v1382 = vshll.u32 2102212464, %v1370
    %v1383 = vshrl.u32 920167782, %v1371
    %v1384 = vor.u32 %v1382, %v1383
    %v1385 = vshll.u32 920167782, %v1370
    %v1386 = vshrl.u32 1326507024, %v1371
    %v1387 = vor.u32 %v1385, %v1386
    %vm1388 = vcmp.lt.s32.totalorder %v1369, 1
    %vm1389 = vcmp.lt.s32.totalorder %v1369, 2
    %vm1390 = vcmp.lt.s32.totalorder %v1369, 3
    %vm1391 = vcmp.lt.s32.totalorder %v1369, 4
    %v1392 = vsel %vm1388, %v1372, %v1375
    %v1393 = vsel %vm1391, %v1381, 2102212464
    %v1394 = vsel %vm1390, %v1378, %v1393
    %v1395 = vsel %vm1389, %v1392, %v1394
    %v1396 = vsel %vm1388, %v1375, %v1378
    %v1397 = vsel %vm1391, %v1384, 920167782
    %v1398 = vsel %vm1390, %v1381, %v1397
    %v1399 = vsel %vm1389, %v1396, %v1398
    %v1400 = vsel %vm1388, %v1378, %v1381
    %v1401 = vsel %vm1391, %v1387, 1326507024
    %v1402 = vsel %vm1390, %v1384, %v1401
    %v1403 = vsel %vm1389, %v1400, %v1402
    %v1404 = vshll.u32 %v1364, 8
    %v1405 = vmul.u32.u64.compose %v1404, %v1403
    %v1406 = vextract.low.u32 %v1405
    %v1407 = vextract.high.u32 %v1405
    %v1408 = vmul.u32.u64.compose %v1404, %v1399
    %v1409 = vextract.low.u32 %v1408
    %v1410 = vextract.high.u32 %v1408
    %v1411 = vmul.u32 %v1404, %v1395
    %v1412 = vadd.s32 %v1407, %v1409
    %vm1413 = vc.u32 %v1407, %v1409
    %v1414 = vadd.s32 %v1410, 1
    %v1415 = vsel %vm1413, %v1414, %v1410
    %v1416 = vadd.s32 %v1411, %v1415
    %v1417 = vadd.s32 %v1416, 536870912
    %v1418 = vshrl.u32 %v1417, 30
    %v1419 = vshll.u32 %v1418, 30
    %v1420 = vsub.s32 %v1416, %v1419
    %vm1421 = vcmp.lt.s32.totalorder %v1420, 0
    %v1422 = vsub.s32 0, %v1420
    %v1423 = vsel %vm1421, %v1422, %v1420
    %v1424 = vclz %v1423
    %v1425 = vsub.s32 %v1424, 2
    %vm1426 = vcmp.gt.s32.totalorder 0, %v1425
    %v1427 = vsel %vm1426, 0, %v1425
    %v1428 = vsub.s32 32, %v1427
    %v1429 = vshll.u32 %v1420, %v1427
    %v1430 = vshrl.u32 %v1412, %v1428
    %v1431 = vor.u32 %v1429, %v1430
    %v1432 = vsub.s32 4294967266, %v1427
    %v1433 = vadd.s32 %v1432, 127
    %v1434 = vshll.u32 %v1433, 23
    %v1435 = vor.u32 4788187, %v1434
    %v1436 = vand.u32 2147483647, %v1435
    %v1438 = vcvt.s32.f32 %v1431
    %v1439 = vmul.f32 %v1438, %v1436
    %v1440 = vxor.u32 %v1439, 2147483648
    %v1441 = vsel %vm1358, %v1440, %v1439
    %v1442 = vsub.s32 4, %v1418
    %v1443 = vsel %vm1358, %v1442, %v1418
    %v1444 = vsel %vm1357, %v108, %v1441
    %v1445 = vsel %vm1357, 0, %v1443
    %v1446 = vcosq.f32.pop %v1444
    %v1447 = vsinq.f32.pop %v1444
    %vm1448 = vweird.f32 %v108
    %v1449 = vand.u32 %v1445, 3
    %vm1450 = vcmp.lt.s32.totalorder %v1449, 2
    %vm1451 = vcmp.eq.s32.totalorder %v1449, 0
    %v1452 = vxor.u32 %v1447, 2147483648
    %v1453 = vsel %vm1451, %v1446, %v1452
    %vm1454 = vcmp.eq.s32.totalorder %v1449, 2
    %v1455 = vxor.u32 %v1446, 2147483648
    %v1456 = vsel %vm1454, %v1455, %v1447
    %v1457 = vsel %vm1450, %v1453, %v1456
    %v1458 = vsel %vm1448, nan, %v1457
    %v1459 = vand.u32 2147483647, %v109
    %vm1460 = vcmp.le.f32.partialorder %v1459, 0.7853982
    %vm1461 = vcmp.lt.s32.totalorder %v109, 0
    %v1462 = vand.u32 %v109, 2139095040
    %v1463 = vshrl.u32 %v1462, 23
    %v1464 = vsub.s32 %v1463, 127
    %v1465 = vand.u32 2147483647, %v109
    %v1466 = vand.u32 %v1465, 8388607
    %v1467 = vor.u32 %v1466, 8388608
    %v1468 = vsub.s32 0, %v1467
    %v1469 = vadd.s32 %v1464, 1
    %vm1470 = vcmp.gt.s32.totalorder %v1469, 0
    %v1471 = vsel %vm1470, %v1469, 0
    %v1472 = vshrl.u32 %v1471, 5
    %v1473 = vand.u32 %v1471, 31
    %v1474 = vsub.s32 32, %v1473
    %v1475 = vshrl.u32 683565275, %v1474
    %v1476 = vshll.u32 683565275, %v1473
    %v1477 = vshrl.u32 2475754826, %v1474
    %v1478 = vor.u32 %v1476, %v1477
    %v1479 = vshll.u32 2475754826, %v1473
    %v1480 = vshrl.u32 2131351028, %v1474
    %v1481 = vor.u32 %v1479, %v1480
    %v1482 = vshll.u32 2131351028, %v1473
    %v1483 = vshrl.u32 2102212464, %v1474
    %v1484 = vor.u32 %v1482, %v1483
    %v1485 = vshll.u32 2102212464, %v1473
    %v1486 = vshrl.u32 920167782, %v1474
    %v1487 = vor.u32 %v1485, %v1486
    %v1488 = vshll.u32 920167782, %v1473
    %v1489 = vshrl.u32 1326507024, %v1474
    %v1490 = vor.u32 %v1488, %v1489
    %vm1491 = vcmp.lt.s32.totalorder %v1472, 1
    %vm1492 = vcmp.lt.s32.totalorder %v1472, 2
    %vm1493 = vcmp.lt.s32.totalorder %v1472, 3
    %vm1494 = vcmp.lt.s32.totalorder %v1472, 4
    %v1495 = vsel %vm1491, %v1475, %v1478
    %v1496 = vsel %vm1494, %v1484, 2102212464
    %v1497 = vsel %vm1493, %v1481, %v1496
    %v1498 = vsel %vm1492, %v1495, %v1497
    %v1499 = vsel %vm1491, %v1478, %v1481
    %v1500 = vsel %vm1494, %v1487, 920167782
    %v1501 = vsel %vm1493, %v1484, %v1500
    %v1502 = vsel %vm1492, %v1499, %v1501
    %v1503 = vsel %vm1491, %v1481, %v1484
    %v1504 = vsel %vm1494, %v1490, 1326507024
    %v1505 = vsel %vm1493, %v1487, %v1504
    %v1506 = vsel %vm1492, %v1503, %v1505
    %v1507 = vshll.u32 %v1467, 8
    %v1508 = vmul.u32.u64.compose %v1507, %v1506
    %v1509 = vextract.low.u32 %v1508
    %v1510 = vextract.high.u32 %v1508
    %v1511 = vmul.u32.u64.compose %v1507, %v1502
    %v1512 = vextract.low.u32 %v1511
    %v1513 = vextract.high.u32 %v1511
    %v1514 = vmul.u32 %v1507, %v1498
    %v1515 = vadd.s32 %v1510, %v1512
    %vm1516 = vc.u32 %v1510, %v1512
    %v1517 = vadd.s32 %v1513, 1
    %v1518 = vsel %vm1516, %v1517, %v1513
    %v1519 = vadd.s32 %v1514, %v1518
    %v1520 = vadd.s32 %v1519, 536870912
    %v1521 = vshrl.u32 %v1520, 30
    %v1522 = vshll.u32 %v1521, 30
    %v1523 = vsub.s32 %v1519, %v1522
    %vm1524 = vcmp.lt.s32.totalorder %v1523, 0
    %v1525 = vsub.s32 0, %v1523
    %v1526 = vsel %vm1524, %v1525, %v1523
    %v1527 = vclz %v1526
    %v1528 = vsub.s32 %v1527, 2
    %vm1529 = vcmp.gt.s32.totalorder 0, %v1528
    %v1530 = vsel %vm1529, 0, %v1528
    %v1531 = vsub.s32 32, %v1530
    %v1532 = vshll.u32 %v1523, %v1530
    %v1533 = vshrl.u32 %v1515, %v1531
    %v1534 = vor.u32 %v1532, %v1533
    %v1535 = vsub.s32 4294967266, %v1530
    %v1536 = vadd.s32 %v1535, 127
    %v1537 = vshll.u32 %v1536, 23
    %v1538 = vor.u32 4788187, %v1537
    %v1539 = vand.u32 2147483647, %v1538
    %v1541 = vcvt.s32.f32 %v1534
    %v1542 = vmul.f32 %v1541, %v1539
    %v1543 = vxor.u32 %v1542, 2147483648
    %v1544 = vsel %vm1461, %v1543, %v1542
    %v1545 = vsub.s32 4, %v1521
    %v1546 = vsel %vm1461, %v1545, %v1521
    %v1547 = vsel %vm1460, %v109, %v1544
    %v1548 = vsel %vm1460, 0, %v1546
    %v1549 = vcosq.f32.pop %v1547
    %v1550 = vsinq.f32.pop %v1547
    %vm1551 = vweird.f32 %v109
    %v1552 = vand.u32 %v1548, 3
    %vm1553 = vcmp.lt.s32.totalorder %v1552, 2
    %vm1554 = vcmp.eq.s32.totalorder %v1552, 0
    %v1555 = vxor.u32 %v1550, 2147483648
    %v1556 = vsel %vm1554, %v1549, %v1555
    %vm1557 = vcmp.eq.s32.totalorder %v1552, 2
    %v1558 = vxor.u32 %v1549, 2147483648
    %v1559 = vsel %vm1557, %v1558, %v1550
    %v1560 = vsel %vm1553, %v1556, %v1559
    %v1561 = vsel %vm1551, nan, %v1560
    %v1562 = vand.u32 2147483647, %v110
    %vm1563 = vcmp.le.f32.partialorder %v1562, 0.7853982
    %vm1564 = vcmp.lt.s32.totalorder %v110, 0
    %v1565 = vand.u32 %v110, 2139095040
    %v1566 = vshrl.u32 %v1565, 23
    %v1567 = vsub.s32 %v1566, 127
    %v1568 = vand.u32 2147483647, %v110
    %v1569 = vand.u32 %v1568, 8388607
    %v1570 = vor.u32 %v1569, 8388608
    %v1571 = vsub.s32 0, %v1570
    %v1572 = vadd.s32 %v1567, 1
    %vm1573 = vcmp.gt.s32.totalorder %v1572, 0
    %v1574 = vsel %vm1573, %v1572, 0
    %v1575 = vshrl.u32 %v1574, 5
    %v1576 = vand.u32 %v1574, 31
    %v1577 = vsub.s32 32, %v1576
    %v1578 = vshrl.u32 683565275, %v1577
    %v1579 = vshll.u32 683565275, %v1576
    %v1580 = vshrl.u32 2475754826, %v1577
    %v1581 = vor.u32 %v1579, %v1580
    %v1582 = vshll.u32 2475754826, %v1576
    %v1583 = vshrl.u32 2131351028, %v1577
    %v1584 = vor.u32 %v1582, %v1583
    %v1585 = vshll.u32 2131351028, %v1576
    %v1586 = vshrl.u32 2102212464, %v1577
    %v1587 = vor.u32 %v1585, %v1586
    %v1588 = vshll.u32 2102212464, %v1576
    %v1589 = vshrl.u32 920167782, %v1577
    %v1590 = vor.u32 %v1588, %v1589
    %v1591 = vshll.u32 920167782, %v1576
    %v1592 = vshrl.u32 1326507024, %v1577
    %v1593 = vor.u32 %v1591, %v1592
    %vm1594 = vcmp.lt.s32.totalorder %v1575, 1
    %vm1595 = vcmp.lt.s32.totalorder %v1575, 2
    %vm1596 = vcmp.lt.s32.totalorder %v1575, 3
    %vm1597 = vcmp.lt.s32.totalorder %v1575, 4
    %v1598 = vsel %vm1594, %v1578, %v1581
    %v1599 = vsel %vm1597, %v1587, 2102212464
    %v1600 = vsel %vm1596, %v1584, %v1599
    %v1601 = vsel %vm1595, %v1598, %v1600
    %v1602 = vsel %vm1594, %v1581, %v1584
    %v1603 = vsel %vm1597, %v1590, 920167782
    %v1604 = vsel %vm1596, %v1587, %v1603
    %v1605 = vsel %vm1595, %v1602, %v1604
    %v1606 = vsel %vm1594, %v1584, %v1587
    %v1607 = vsel %vm1597, %v1593, 1326507024
    %v1608 = vsel %vm1596, %v1590, %v1607
    %v1609 = vsel %vm1595, %v1606, %v1608
    %v1610 = vshll.u32 %v1570, 8
    %v1611 = vmul.u32.u64.compose %v1610, %v1609
    %v1612 = vextract.low.u32 %v1611
    %v1613 = vextract.high.u32 %v1611
    %v1614 = vmul.u32.u64.compose %v1610, %v1605
    %v1615 = vextract.low.u32 %v1614
    %v1616 = vextract.high.u32 %v1614
    %v1617 = vmul.u32 %v1610, %v1601
    %v1618 = vadd.s32 %v1613, %v1615
    %vm1619 = vc.u32 %v1613, %v1615
    %v1620 = vadd.s32 %v1616, 1
    %v1621 = vsel %vm1619, %v1620, %v1616
    %v1622 = vadd.s32 %v1617, %v1621
    %v1623 = vadd.s32 %v1622, 536870912
    %v1624 = vshrl.u32 %v1623, 30
    %v1625 = vshll.u32 %v1624, 30
    %v1626 = vsub.s32 %v1622, %v1625
    %vm1627 = vcmp.lt.s32.totalorder %v1626, 0
    %v1628 = vsub.s32 0, %v1626
    %v1629 = vsel %vm1627, %v1628, %v1626
    %v1630 = vclz %v1629
    %v1631 = vsub.s32 %v1630, 2
    %vm1632 = vcmp.gt.s32.totalorder 0, %v1631
    %v1633 = vsel %vm1632, 0, %v1631
    %v1634 = vsub.s32 32, %v1633
    %v1635 = vshll.u32 %v1626, %v1633
    %v1636 = vshrl.u32 %v1618, %v1634
    %v1637 = vor.u32 %v1635, %v1636
    %v1638 = vsub.s32 4294967266, %v1633
    %v1639 = vadd.s32 %v1638, 127
    %v1640 = vshll.u32 %v1639, 23
    %v1641 = vor.u32 4788187, %v1640
    %v1642 = vand.u32 2147483647, %v1641
    %v1644 = vcvt.s32.f32 %v1637
    %v1645 = vmul.f32 %v1644, %v1642
    %v1646 = vxor.u32 %v1645, 2147483648
    %v1647 = vsel %vm1564, %v1646, %v1645
    %v1648 = vsub.s32 4, %v1624
    %v1649 = vsel %vm1564, %v1648, %v1624
    %v1650 = vsel %vm1563, %v110, %v1647
    %v1651 = vsel %vm1563, 0, %v1649
    %v1652 = vcosq.f32.pop %v1650
    %v1653 = vsinq.f32.pop %v1650
    %vm1654 = vweird.f32 %v110
    %v1655 = vand.u32 %v1651, 3
    %vm1656 = vcmp.lt.s32.totalorder %v1655, 2
    %vm1657 = vcmp.eq.s32.totalorder %v1655, 0
    %v1658 = vxor.u32 %v1653, 2147483648
    %v1659 = vsel %vm1657, %v1652, %v1658
    %vm1660 = vcmp.eq.s32.totalorder %v1655, 2
    %v1661 = vxor.u32 %v1652, 2147483648
    %v1662 = vsel %vm1660, %v1661, %v1653
    %v1663 = vsel %vm1656, %v1659, %v1662
    %v1664 = vsel %vm1654, nan, %v1663
    %v1665 = vand.u32 2147483647, %v111
    %vm1666 = vcmp.le.f32.partialorder %v1665, 0.7853982
    %vm1667 = vcmp.lt.s32.totalorder %v111, 0
    %v1668 = vand.u32 %v111, 2139095040
    %v1669 = vshrl.u32 %v1668, 23
    %v1670 = vsub.s32 %v1669, 127
    %v1671 = vand.u32 2147483647, %v111
    %v1672 = vand.u32 %v1671, 8388607
    %v1673 = vor.u32 %v1672, 8388608
    %v1674 = vsub.s32 0, %v1673
    %v1675 = vadd.s32 %v1670, 1
    %vm1676 = vcmp.gt.s32.totalorder %v1675, 0
    %v1677 = vsel %vm1676, %v1675, 0
    %v1678 = vshrl.u32 %v1677, 5
    %v1679 = vand.u32 %v1677, 31
    %v1680 = vsub.s32 32, %v1679
    %v1681 = vshrl.u32 683565275, %v1680
    %v1682 = vshll.u32 683565275, %v1679
    %v1683 = vshrl.u32 2475754826, %v1680
    %v1684 = vor.u32 %v1682, %v1683
    %v1685 = vshll.u32 2475754826, %v1679
    %v1686 = vshrl.u32 2131351028, %v1680
    %v1687 = vor.u32 %v1685, %v1686
    %v1688 = vshll.u32 2131351028, %v1679
    %v1689 = vshrl.u32 2102212464, %v1680
    %v1690 = vor.u32 %v1688, %v1689
    %v1691 = vshll.u32 2102212464, %v1679
    %v1692 = vshrl.u32 920167782, %v1680
    %v1693 = vor.u32 %v1691, %v1692
    %v1694 = vshll.u32 920167782, %v1679
    %v1695 = vshrl.u32 1326507024, %v1680
    %v1696 = vor.u32 %v1694, %v1695
    %vm1697 = vcmp.lt.s32.totalorder %v1678, 1
    %vm1698 = vcmp.lt.s32.totalorder %v1678, 2
    %vm1699 = vcmp.lt.s32.totalorder %v1678, 3
    %vm1700 = vcmp.lt.s32.totalorder %v1678, 4
    %v1701 = vsel %vm1697, %v1681, %v1684
    %v1702 = vsel %vm1700, %v1690, 2102212464
    %v1703 = vsel %vm1699, %v1687, %v1702
    %v1704 = vsel %vm1698, %v1701, %v1703
    %v1705 = vsel %vm1697, %v1684, %v1687
    %v1706 = vsel %vm1700, %v1693, 920167782
    %v1707 = vsel %vm1699, %v1690, %v1706
    %v1708 = vsel %vm1698, %v1705, %v1707
    %v1709 = vsel %vm1697, %v1687, %v1690
    %v1710 = vsel %vm1700, %v1696, 1326507024
    %v1711 = vsel %vm1699, %v1693, %v1710
    %v1712 = vsel %vm1698, %v1709, %v1711
    %v1713 = vshll.u32 %v1673, 8
    %v1714 = vmul.u32.u64.compose %v1713, %v1712
    %v1715 = vextract.low.u32 %v1714
    %v1716 = vextract.high.u32 %v1714
    %v1717 = vmul.u32.u64.compose %v1713, %v1708
    %v1718 = vextract.low.u32 %v1717
    %v1719 = vextract.high.u32 %v1717
    %v1720 = vmul.u32 %v1713, %v1704
    %v1721 = vadd.s32 %v1716, %v1718
    %vm1722 = vc.u32 %v1716, %v1718
    %v1723 = vadd.s32 %v1719, 1
    %v1724 = vsel %vm1722, %v1723, %v1719
    %v1725 = vadd.s32 %v1720, %v1724
    %v1726 = vadd.s32 %v1725, 536870912
    %v1727 = vshrl.u32 %v1726, 30
    %v1728 = vshll.u32 %v1727, 30
    %v1729 = vsub.s32 %v1725, %v1728
    %vm1730 = vcmp.lt.s32.totalorder %v1729, 0
    %v1731 = vsub.s32 0, %v1729
    %v1732 = vsel %vm1730, %v1731, %v1729
    %v1733 = vclz %v1732
    %v1734 = vsub.s32 %v1733, 2
    %vm1735 = vcmp.gt.s32.totalorder 0, %v1734
    %v1736 = vsel %vm1735, 0, %v1734
    %v1737 = vsub.s32 32, %v1736
    %v1738 = vshll.u32 %v1729, %v1736
    %v1739 = vshrl.u32 %v1721, %v1737
    %v1740 = vor.u32 %v1738, %v1739
    %v1741 = vsub.s32 4294967266, %v1736
    %v1742 = vadd.s32 %v1741, 127
    %v1743 = vshll.u32 %v1742, 23
    %v1744 = vor.u32 4788187, %v1743
    %v1745 = vand.u32 2147483647, %v1744
    %v1747 = vcvt.s32.f32 %v1740
    %v1748 = vmul.f32 %v1747, %v1745
    %v1749 = vxor.u32 %v1748, 2147483648
    %v1750 = vsel %vm1667, %v1749, %v1748
    %v1751 = vsub.s32 4, %v1727
    %v1752 = vsel %vm1667, %v1751, %v1727
    %v1753 = vsel %vm1666, %v111, %v1750
    %v1754 = vsel %vm1666, 0, %v1752
    %v1755 = vcosq.f32.pop %v1753
    %v1756 = vsinq.f32.pop %v1753
    %vm1757 = vweird.f32 %v111
    %v1758 = vand.u32 %v1754, 3
    %vm1759 = vcmp.lt.s32.totalorder %v1758, 2
    %vm1760 = vcmp.eq.s32.totalorder %v1758, 0
    %v1761 = vxor.u32 %v1756, 2147483648
    %v1762 = vsel %vm1760, %v1755, %v1761
    %vm1763 = vcmp.eq.s32.totalorder %v1758, 2
    %v1764 = vxor.u32 %v1755, 2147483648
    %v1765 = vsel %vm1763, %v1764, %v1756
    %v1766 = vsel %vm1759, %v1762, %v1765
    %v1767 = vsel %vm1757, nan, %v1766
    %v1768 = vstv %s27
    %v1769 = vadd.f32 %v215, %v1768
    %v1770 = vadd.f32 %v319, %v1768
    %v1771 = vadd.f32 %v423, %v1768
    %v1772 = vadd.f32 %v527, %v1768
    %v1773 = vadd.f32 %v631, %v1768
    %v1774 = vadd.f32 %v735, %v1768
    %v1775 = vadd.f32 %v839, %v1768
    %v1776 = vadd.f32 %v943, %v1768
    %v1777 = vlog2.pop %v1769
    %v1778 = vmul.f32 %v1777, 0.6931472
    %v1779 = vlog2.pop %v1770
    %v1780 = vmul.f32 %v1779, 0.6931472
    %v1781 = vlog2.pop %v1771
    %v1782 = vmul.f32 %v1781, 0.6931472
    %v1783 = vlog2.pop %v1772
    %v1784 = vmul.f32 %v1783, 0.6931472
    %v1785 = vlog2.pop %v1773
    %v1786 = vmul.f32 %v1785, 0.6931472
    %v1787 = vlog2.pop %v1774
    %v1788 = vmul.f32 %v1787, 0.6931472
    %v1789 = vlog2.pop %v1775
    %v1790 = vmul.f32 %v1789, 0.6931472
    %v1791 = vlog2.pop %v1776
    %v1792 = vmul.f32 %v1791, 0.6931472
    %v1793 = vlaneseq
    %v1794 = vand.u32 %v1793, 127
    %v1795 = vadd.s32 %v1794, 128
    %v1796 = vadd.s32 %v1794, 256
    %v1797 = vadd.s32 %v1794, 384
    %v1798 = vadd.s32 %v1794, 512
    %v1799 = vadd.s32 %v1794, 640
    %v1800 = vadd.s32 %v1794, 768
    %v1801 = vadd.s32 %v1794, 896
    %1802 = vrot.lane.b32.xlu0 %v1778, 1
    %v1803 = vpop.permute.xlu0 %1802
    %1804 = vrot.lane.b32.xlu0 %v1780, 1
    %v1805 = vpop.permute.xlu0 %1804
    %1806 = vrot.lane.b32.xlu0 %v1782, 1
    %v1807 = vpop.permute.xlu0 %1806
    %1808 = vrot.lane.b32.xlu0 %v1784, 1
    %v1809 = vpop.permute.xlu0 %1808
    %1810 = vrot.lane.b32.xlu0 %v1786, 1
    %v1811 = vpop.permute.xlu0 %1810
    %1812 = vrot.lane.b32.xlu0 %v1788, 1
    %v1813 = vpop.permute.xlu0 %1812
    %1814 = vrot.lane.b32.xlu0 %v1790, 1
    %v1815 = vpop.permute.xlu0 %1814
    %1816 = vrot.lane.b32.xlu0 %v1792, 1
    %v1817 = vpop.permute.xlu0 %1816
    %vm1818 = vcmp.lt.s32.totalorder %v1794, 1
    %v1819 = vsel %vm1818, %v1815, %v1817
    %v1820 = vsel %vm1818, %v1813, %v1815
    %v1821 = vsel %vm1818, %v1811, %v1813
    %v1822 = vsel %vm1818, %v1809, %v1811
    %v1823 = vsel %vm1818, %v1807, %v1809
    %v1824 = vsel %vm1818, %v1805, %v1807
    %v1825 = vsel %vm1818, %v1803, %v1805
    %v1826 = vsel %vm1818, %v1817, %v1803
    %vm1827 = vcmp.ge.s32.totalorder %v1794, 1
    %vm1828 = vcmp.ge.s32.totalorder %v1795, 1
    %vm1829 = vcmp.ge.s32.totalorder %v1796, 1
    %vm1830 = vcmp.ge.s32.totalorder %v1797, 1
    %vm1831 = vcmp.ge.s32.totalorder %v1798, 1
    %vm1832 = vcmp.ge.s32.totalorder %v1799, 1
    %vm1833 = vcmp.ge.s32.totalorder %v1800, 1
    %vm1834 = vcmp.ge.s32.totalorder %v1801, 1
    %v1835 = vsel %vm1827, %v1826, 0.0
    %v1836 = vsel %vm1828, %v1825, 0.0
    %v1837 = vsel %vm1829, %v1824, 0.0
    %v1838 = vsel %vm1830, %v1823, 0.0
    %v1839 = vsel %vm1831, %v1822, 0.0
    %v1840 = vsel %vm1832, %v1821, 0.0
    %v1841 = vsel %vm1833, %v1820, 0.0
    %v1842 = vsel %vm1834, %v1819, 0.0
    %v1843 = vadd.f32 %v1778, %v1835
    %v1844 = vadd.f32 %v1780, %v1836
    %v1845 = vadd.f32 %v1782, %v1837
    %v1846 = vadd.f32 %v1784, %v1838
    %v1847 = vadd.f32 %v1786, %v1839
    %v1848 = vadd.f32 %v1788, %v1840
    %v1849 = vadd.f32 %v1790, %v1841
    %v1850 = vadd.f32 %v1792, %v1842
    %1851 = vrot.lane.b32.xlu0 %v1843, 2
    %v1852 = vpop.permute.xlu0 %1851
    %1853 = vrot.lane.b32.xlu0 %v1844, 2
    %v1854 = vpop.permute.xlu0 %1853
    %1855 = vrot.lane.b32.xlu0 %v1845, 2
    %v1856 = vpop.permute.xlu0 %1855
    %1857 = vrot.lane.b32.xlu0 %v1846, 2
    %v1858 = vpop.permute.xlu0 %1857
    %1859 = vrot.lane.b32.xlu0 %v1847, 2
    %v1860 = vpop.permute.xlu0 %1859
    %1861 = vrot.lane.b32.xlu0 %v1848, 2
    %v1862 = vpop.permute.xlu0 %1861
    %1863 = vrot.lane.b32.xlu0 %v1849, 2
    %v1864 = vpop.permute.xlu0 %1863
    %1865 = vrot.lane.b32.xlu0 %v1850, 2
    %v1866 = vpop.permute.xlu0 %1865
    %vm1867 = vcmp.lt.s32.totalorder %v1794, 2
    %v1868 = vsel %vm1867, %v1864, %v1866
    %v1869 = vsel %vm1867, %v1862, %v1864
    %v1870 = vsel %vm1867, %v1860, %v1862
    %v1871 = vsel %vm1867, %v1858, %v1860
    %v1872 = vsel %vm1867, %v1856, %v1858
    %v1873 = vsel %vm1867, %v1854, %v1856
    %v1874 = vsel %vm1867, %v1852, %v1854
    %v1875 = vsel %vm1867, %v1866, %v1852
    %vm1876 = vcmp.ge.s32.totalorder %v1794, 2
    %vm1877 = vcmp.ge.s32.totalorder %v1795, 2
    %vm1878 = vcmp.ge.s32.totalorder %v1796, 2
    %vm1879 = vcmp.ge.s32.totalorder %v1797, 2
    %vm1880 = vcmp.ge.s32.totalorder %v1798, 2
    %vm1881 = vcmp.ge.s32.totalorder %v1799, 2
    %vm1882 = vcmp.ge.s32.totalorder %v1800, 2
    %vm1883 = vcmp.ge.s32.totalorder %v1801, 2
    %v1884 = vsel %vm1876, %v1875, 0.0
    %v1885 = vsel %vm1877, %v1874, 0.0
    %v1886 = vsel %vm1878, %v1873, 0.0
    %v1887 = vsel %vm1879, %v1872, 0.0
    %v1888 = vsel %vm1880, %v1871, 0.0
    %v1889 = vsel %vm1881, %v1870, 0.0
    %v1890 = vsel %vm1882, %v1869, 0.0
    %v1891 = vsel %vm1883, %v1868, 0.0
    %v1892 = vadd.f32 %v1843, %v1884
    %v1893 = vadd.f32 %v1844, %v1885
    %v1894 = vadd.f32 %v1845, %v1886
    %v1895 = vadd.f32 %v1846, %v1887
    %v1896 = vadd.f32 %v1847, %v1888
    %v1897 = vadd.f32 %v1848, %v1889
    %v1898 = vadd.f32 %v1849, %v1890
    %v1899 = vadd.f32 %v1850, %v1891
    %1900 = vrot.lane.b32.xlu0 %v1892, 4
    %v1901 = vpop.permute.xlu0 %1900
    %1902 = vrot.lane.b32.xlu0 %v1893, 4
    %v1903 = vpop.permute.xlu0 %1902
    %1904 = vrot.lane.b32.xlu0 %v1894, 4
    %v1905 = vpop.permute.xlu0 %1904
    %1906 = vrot.lane.b32.xlu0 %v1895, 4
    %v1907 = vpop.permute.xlu0 %1906
    %1908 = vrot.lane.b32.xlu0 %v1896, 4
    %v1909 = vpop.permute.xlu0 %1908
    %1910 = vrot.lane.b32.xlu0 %v1897, 4
    %v1911 = vpop.permute.xlu0 %1910
    %1912 = vrot.lane.b32.xlu0 %v1898, 4
    %v1913 = vpop.permute.xlu0 %1912
    %1914 = vrot.lane.b32.xlu0 %v1899, 4
    %v1915 = vpop.permute.xlu0 %1914
    %vm1916 = vcmp.lt.s32.totalorder %v1794, 4
    %v1917 = vsel %vm1916, %v1913, %v1915
    %v1918 = vsel %vm1916, %v1911, %v1913
    %v1919 = vsel %vm1916, %v1909, %v1911
    %v1920 = vsel %vm1916, %v1907, %v1909
    %v1921 = vsel %vm1916, %v1905, %v1907
    %v1922 = vsel %vm1916, %v1903, %v1905
    %v1923 = vsel %vm1916, %v1901, %v1903
    %v1924 = vsel %vm1916, %v1915, %v1901
    %vm1925 = vcmp.ge.s32.totalorder %v1794, 4
    %vm1926 = vcmp.ge.s32.totalorder %v1795, 4
    %vm1927 = vcmp.ge.s32.totalorder %v1796, 4
    %vm1928 = vcmp.ge.s32.totalorder %v1797, 4
    %vm1929 = vcmp.ge.s32.totalorder %v1798, 4
    %vm1930 = vcmp.ge.s32.totalorder %v1799, 4
    %vm1931 = vcmp.ge.s32.totalorder %v1800, 4
    %vm1932 = vcmp.ge.s32.totalorder %v1801, 4
    %v1933 = vsel %vm1925, %v1924, 0.0
    %v1934 = vsel %vm1926, %v1923, 0.0
    %v1935 = vsel %vm1927, %v1922, 0.0
    %v1936 = vsel %vm1928, %v1921, 0.0
    %v1937 = vsel %vm1929, %v1920, 0.0
    %v1938 = vsel %vm1930, %v1919, 0.0
    %v1939 = vsel %vm1931, %v1918, 0.0
    %v1940 = vsel %vm1932, %v1917, 0.0
    %v1941 = vadd.f32 %v1892, %v1933
    %v1942 = vadd.f32 %v1893, %v1934
    %v1943 = vadd.f32 %v1894, %v1935
    %v1944 = vadd.f32 %v1895, %v1936
    %v1945 = vadd.f32 %v1896, %v1937
    %v1946 = vadd.f32 %v1897, %v1938
    %v1947 = vadd.f32 %v1898, %v1939
    %v1948 = vadd.f32 %v1899, %v1940
    %1949 = vrot.lane.b32.xlu0 %v1941, 8
    %v1950 = vpop.permute.xlu0 %1949
    %1951 = vrot.lane.b32.xlu0 %v1942, 8
    %v1952 = vpop.permute.xlu0 %1951
    %1953 = vrot.lane.b32.xlu0 %v1943, 8
    %v1954 = vpop.permute.xlu0 %1953
    %1955 = vrot.lane.b32.xlu0 %v1944, 8
    %v1956 = vpop.permute.xlu0 %1955
    %1957 = vrot.lane.b32.xlu0 %v1945, 8
    %v1958 = vpop.permute.xlu0 %1957
    %1959 = vrot.lane.b32.xlu0 %v1946, 8
    %v1960 = vpop.permute.xlu0 %1959
    %1961 = vrot.lane.b32.xlu0 %v1947, 8
    %v1962 = vpop.permute.xlu0 %1961
    %1963 = vrot.lane.b32.xlu0 %v1948, 8
    %v1964 = vpop.permute.xlu0 %1963
    %vm1965 = vcmp.lt.s32.totalorder %v1794, 8
    %v1966 = vsel %vm1965, %v1962, %v1964
    %v1967 = vsel %vm1965, %v1960, %v1962
    %v1968 = vsel %vm1965, %v1958, %v1960
    %v1969 = vsel %vm1965, %v1956, %v1958
    %v1970 = vsel %vm1965, %v1954, %v1956
    %v1971 = vsel %vm1965, %v1952, %v1954
    %v1972 = vsel %vm1965, %v1950, %v1952
    %v1973 = vsel %vm1965, %v1964, %v1950
    %vm1974 = vcmp.ge.s32.totalorder %v1794, 8
    %vm1975 = vcmp.ge.s32.totalorder %v1795, 8
    %vm1976 = vcmp.ge.s32.totalorder %v1796, 8
    %vm1977 = vcmp.ge.s32.totalorder %v1797, 8
    %vm1978 = vcmp.ge.s32.totalorder %v1798, 8
    %vm1979 = vcmp.ge.s32.totalorder %v1799, 8
    %vm1980 = vcmp.ge.s32.totalorder %v1800, 8
    %vm1981 = vcmp.ge.s32.totalorder %v1801, 8
    %v1982 = vsel %vm1974, %v1973, 0.0
    %v1983 = vsel %vm1975, %v1972, 0.0
    %v1984 = vsel %vm1976, %v1971, 0.0
    %v1985 = vsel %vm1977, %v1970, 0.0
    %v1986 = vsel %vm1978, %v1969, 0.0
    %v1987 = vsel %vm1979, %v1968, 0.0
    %v1988 = vsel %vm1980, %v1967, 0.0
    %v1989 = vsel %vm1981, %v1966, 0.0
    %v1990 = vadd.f32 %v1941, %v1982
    %v1991 = vadd.f32 %v1942, %v1983
    %v1992 = vadd.f32 %v1943, %v1984
    %v1993 = vadd.f32 %v1944, %v1985
    %v1994 = vadd.f32 %v1945, %v1986
    %v1995 = vadd.f32 %v1946, %v1987
    %v1996 = vadd.f32 %v1947, %v1988
    %v1997 = vadd.f32 %v1948, %v1989
    %1998 = vrot.lane.b32.xlu0 %v1990, 16
    %v1999 = vpop.permute.xlu0 %1998
    %2000 = vrot.lane.b32.xlu0 %v1991, 16
    %v2001 = vpop.permute.xlu0 %2000
    %2002 = vrot.lane.b32.xlu0 %v1992, 16
    %v2003 = vpop.permute.xlu0 %2002
    %2004 = vrot.lane.b32.xlu0 %v1993, 16
    %v2005 = vpop.permute.xlu0 %2004
    %2006 = vrot.lane.b32.xlu0 %v1994, 16
    %v2007 = vpop.permute.xlu0 %2006
    %2008 = vrot.lane.b32.xlu0 %v1995, 16
    %v2009 = vpop.permute.xlu0 %2008
    %2010 = vrot.lane.b32.xlu0 %v1996, 16
    %v2011 = vpop.permute.xlu0 %2010
    %2012 = vrot.lane.b32.xlu0 %v1997, 16
    %v2013 = vpop.permute.xlu0 %2012
    %vm2014 = vcmp.lt.s32.totalorder %v1794, 16
    %v2015 = vsel %vm2014, %v2011, %v2013
    %v2016 = vsel %vm2014, %v2009, %v2011
    %v2017 = vsel %vm2014, %v2007, %v2009
    %v2018 = vsel %vm2014, %v2005, %v2007
    %v2019 = vsel %vm2014, %v2003, %v2005
    %v2020 = vsel %vm2014, %v2001, %v2003
    %v2021 = vsel %vm2014, %v1999, %v2001
    %v2022 = vsel %vm2014, %v2013, %v1999
    %vm2023 = vcmp.ge.s32.totalorder %v1794, 16
    %vm2024 = vcmp.ge.s32.totalorder %v1795, 16
    %vm2025 = vcmp.ge.s32.totalorder %v1796, 16
    %vm2026 = vcmp.ge.s32.totalorder %v1797, 16
    %vm2027 = vcmp.ge.s32.totalorder %v1798, 16
    %vm2028 = vcmp.ge.s32.totalorder %v1799, 16
    %vm2029 = vcmp.ge.s32.totalorder %v1800, 16
    %vm2030 = vcmp.ge.s32.totalorder %v1801, 16
    %v2031 = vsel %vm2023, %v2022, 0.0
    %v2032 = vsel %vm2024, %v2021, 0.0
    %v2033 = vsel %vm2025, %v2020, 0.0
    %v2034 = vsel %vm2026, %v2019, 0.0
    %v2035 = vsel %vm2027, %v2018, 0.0
    %v2036 = vsel %vm2028, %v2017, 0.0
    %v2037 = vsel %vm2029, %v2016, 0.0
    %v2038 = vsel %vm2030, %v2015, 0.0
    %v2039 = vadd.f32 %v1990, %v2031
    %v2040 = vadd.f32 %v1991, %v2032
    %v2041 = vadd.f32 %v1992, %v2033
    %v2042 = vadd.f32 %v1993, %v2034
    %v2043 = vadd.f32 %v1994, %v2035
    %v2044 = vadd.f32 %v1995, %v2036
    %v2045 = vadd.f32 %v1996, %v2037
    %v2046 = vadd.f32 %v1997, %v2038
    %2047 = vrot.lane.b32.xlu0 %v2039, 32
    %v2048 = vpop.permute.xlu0 %2047
    %2049 = vrot.lane.b32.xlu0 %v2040, 32
    %v2050 = vpop.permute.xlu0 %2049
    %2051 = vrot.lane.b32.xlu0 %v2041, 32
    %v2052 = vpop.permute.xlu0 %2051
    %2053 = vrot.lane.b32.xlu0 %v2042, 32
    %v2054 = vpop.permute.xlu0 %2053
    %2055 = vrot.lane.b32.xlu0 %v2043, 32
    %v2056 = vpop.permute.xlu0 %2055
    %2057 = vrot.lane.b32.xlu0 %v2044, 32
    %v2058 = vpop.permute.xlu0 %2057
    %2059 = vrot.lane.b32.xlu0 %v2045, 32
    %v2060 = vpop.permute.xlu0 %2059
    %2061 = vrot.lane.b32.xlu0 %v2046, 32
    %v2062 = vpop.permute.xlu0 %2061
    %vm2063 = vcmp.lt.s32.totalorder %v1794, 32
    %v2064 = vsel %vm2063, %v2060, %v2062
    %v2065 = vsel %vm2063, %v2058, %v2060
    %v2066 = vsel %vm2063, %v2056, %v2058
    %v2067 = vsel %vm2063, %v2054, %v2056
    %v2068 = vsel %vm2063, %v2052, %v2054
    %v2069 = vsel %vm2063, %v2050, %v2052
    %v2070 = vsel %vm2063, %v2048, %v2050
    %v2071 = vsel %vm2063, %v2062, %v2048
    %vm2072 = vcmp.ge.s32.totalorder %v1794, 32
    %vm2073 = vcmp.ge.s32.totalorder %v1795, 32
    %vm2074 = vcmp.ge.s32.totalorder %v1796, 32
    %vm2075 = vcmp.ge.s32.totalorder %v1797, 32
    %vm2076 = vcmp.ge.s32.totalorder %v1798, 32
    %vm2077 = vcmp.ge.s32.totalorder %v1799, 32
    %vm2078 = vcmp.ge.s32.totalorder %v1800, 32
    %vm2079 = vcmp.ge.s32.totalorder %v1801, 32
    %v2080 = vsel %vm2072, %v2071, 0.0
    %v2081 = vsel %vm2073, %v2070, 0.0
    %v2082 = vsel %vm2074, %v2069, 0.0
    %v2083 = vsel %vm2075, %v2068, 0.0
    %v2084 = vsel %vm2076, %v2067, 0.0
    %v2085 = vsel %vm2077, %v2066, 0.0
    %v2086 = vsel %vm2078, %v2065, 0.0
    %v2087 = vsel %vm2079, %v2064, 0.0
    %v2088 = vadd.f32 %v2039, %v2080
    %v2089 = vadd.f32 %v2040, %v2081
    %v2090 = vadd.f32 %v2041, %v2082
    %v2091 = vadd.f32 %v2042, %v2083
    %v2092 = vadd.f32 %v2043, %v2084
    %v2093 = vadd.f32 %v2044, %v2085
    %v2094 = vadd.f32 %v2045, %v2086
    %v2095 = vadd.f32 %v2046, %v2087
    %2096 = vrot.lane.b32.xlu0 %v2088, 64
    %v2097 = vpop.permute.xlu0 %2096
    %2098 = vrot.lane.b32.xlu0 %v2089, 64
    %v2099 = vpop.permute.xlu0 %2098
    %2100 = vrot.lane.b32.xlu0 %v2090, 64
    %v2101 = vpop.permute.xlu0 %2100
    %2102 = vrot.lane.b32.xlu0 %v2091, 64
    %v2103 = vpop.permute.xlu0 %2102
    %2104 = vrot.lane.b32.xlu0 %v2092, 64
    %v2105 = vpop.permute.xlu0 %2104
    %2106 = vrot.lane.b32.xlu0 %v2093, 64
    %v2107 = vpop.permute.xlu0 %2106
    %2108 = vrot.lane.b32.xlu0 %v2094, 64
    %v2109 = vpop.permute.xlu0 %2108
    %2110 = vrot.lane.b32.xlu0 %v2095, 64
    %v2111 = vpop.permute.xlu0 %2110
    %vm2112 = vcmp.lt.s32.totalorder %v1794, 64
    %v2113 = vsel %vm2112, %v2109, %v2111
    %v2114 = vsel %vm2112, %v2107, %v2109
    %v2115 = vsel %vm2112, %v2105, %v2107
    %v2116 = vsel %vm2112, %v2103, %v2105
    %v2117 = vsel %vm2112, %v2101, %v2103
    %v2118 = vsel %vm2112, %v2099, %v2101
    %v2119 = vsel %vm2112, %v2097, %v2099
    %v2120 = vsel %vm2112, %v2111, %v2097
    %vm2121 = vcmp.ge.s32.totalorder %v1794, 64
    %vm2122 = vcmp.ge.s32.totalorder %v1795, 64
    %vm2123 = vcmp.ge.s32.totalorder %v1796, 64
    %vm2124 = vcmp.ge.s32.totalorder %v1797, 64
    %vm2125 = vcmp.ge.s32.totalorder %v1798, 64
    %vm2126 = vcmp.ge.s32.totalorder %v1799, 64
    %vm2127 = vcmp.ge.s32.totalorder %v1800, 64
    %vm2128 = vcmp.ge.s32.totalorder %v1801, 64
    %v2129 = vsel %vm2121, %v2120, 0.0
    %v2130 = vsel %vm2122, %v2119, 0.0
    %v2131 = vsel %vm2123, %v2118, 0.0
    %v2132 = vsel %vm2124, %v2117, 0.0
    %v2133 = vsel %vm2125, %v2116, 0.0
    %v2134 = vsel %vm2126, %v2115, 0.0
    %v2135 = vsel %vm2127, %v2114, 0.0
    %v2136 = vsel %vm2128, %v2113, 0.0
    %v2137 = vadd.f32 %v2088, %v2129
    %v2138 = vadd.f32 %v2089, %v2130
    %v2139 = vadd.f32 %v2090, %v2131
    %v2140 = vadd.f32 %v2091, %v2132
    %v2141 = vadd.f32 %v2092, %v2133
    %v2142 = vadd.f32 %v2093, %v2134
    %v2143 = vadd.f32 %v2094, %v2135
    %v2144 = vadd.f32 %v2095, %v2136
    %vm2145 = vcmp.ge.s32.totalorder %v1794, 128
    %vm2146 = vcmp.ge.s32.totalorder %v1795, 128
    %vm2147 = vcmp.ge.s32.totalorder %v1796, 128
    %vm2148 = vcmp.ge.s32.totalorder %v1797, 128
    %vm2149 = vcmp.ge.s32.totalorder %v1798, 128
    %vm2150 = vcmp.ge.s32.totalorder %v1799, 128
    %vm2151 = vcmp.ge.s32.totalorder %v1800, 128
    %vm2152 = vcmp.ge.s32.totalorder %v1801, 128
    %v2153 = vsel %vm2145, %v2144, 0.0
    %v2154 = vsel %vm2146, %v2137, 0.0
    %v2155 = vsel %vm2147, %v2138, 0.0
    %v2156 = vsel %vm2148, %v2139, 0.0
    %v2157 = vsel %vm2149, %v2140, 0.0
    %v2158 = vsel %vm2150, %v2141, 0.0
    %v2159 = vsel %vm2151, %v2142, 0.0
    %v2160 = vsel %vm2152, %v2143, 0.0
    %v2161 = vadd.f32 %v2137, %v2153
    %v2162 = vadd.f32 %v2138, %v2154
    %v2163 = vadd.f32 %v2139, %v2155
    %v2164 = vadd.f32 %v2140, %v2156
    %v2165 = vadd.f32 %v2141, %v2157
    %v2166 = vadd.f32 %v2142, %v2158
    %v2167 = vadd.f32 %v2143, %v2159
    %v2168 = vadd.f32 %v2144, %v2160
    %vm2169 = vcmp.ge.s32.totalorder %v1794, 256
    %vm2170 = vcmp.ge.s32.totalorder %v1795, 256
    %vm2171 = vcmp.ge.s32.totalorder %v1796, 256
    %vm2172 = vcmp.ge.s32.totalorder %v1797, 256
    %vm2173 = vcmp.ge.s32.totalorder %v1798, 256
    %vm2174 = vcmp.ge.s32.totalorder %v1799, 256
    %vm2175 = vcmp.ge.s32.totalorder %v1800, 256
    %vm2176 = vcmp.ge.s32.totalorder %v1801, 256
    %v2177 = vsel %vm2169, %v2167, 0.0
    %v2178 = vsel %vm2170, %v2168, 0.0
    %v2179 = vsel %vm2171, %v2161, 0.0
    %v2180 = vsel %vm2172, %v2162, 0.0
    %v2181 = vsel %vm2173, %v2163, 0.0
    %v2182 = vsel %vm2174, %v2164, 0.0
    %v2183 = vsel %vm2175, %v2165, 0.0
    %v2184 = vsel %vm2176, %v2166, 0.0
    %v2185 = vadd.f32 %v2161, %v2177
    %v2186 = vadd.f32 %v2162, %v2178
    %v2187 = vadd.f32 %v2163, %v2179
    %v2188 = vadd.f32 %v2164, %v2180
    %v2189 = vadd.f32 %v2165, %v2181
    %v2190 = vadd.f32 %v2166, %v2182
    %v2191 = vadd.f32 %v2167, %v2183
    %v2192 = vadd.f32 %v2168, %v2184
    %vm2193 = vcmp.ge.s32.totalorder %v1794, 512
    %vm2194 = vcmp.ge.s32.totalorder %v1795, 512
    %vm2195 = vcmp.ge.s32.totalorder %v1796, 512
    %vm2196 = vcmp.ge.s32.totalorder %v1797, 512
    %vm2197 = vcmp.ge.s32.totalorder %v1798, 512
    %vm2198 = vcmp.ge.s32.totalorder %v1799, 512
    %vm2199 = vcmp.ge.s32.totalorder %v1800, 512
    %vm2200 = vcmp.ge.s32.totalorder %v1801, 512
    %v2201 = vsel %vm2193, %v2189, 0.0
    %v2202 = vsel %vm2194, %v2190, 0.0
    %v2203 = vsel %vm2195, %v2191, 0.0
    %v2204 = vsel %vm2196, %v2192, 0.0
    %v2205 = vsel %vm2197, %v2185, 0.0
    %v2206 = vsel %vm2198, %v2186, 0.0
    %v2207 = vsel %vm2199, %v2187, 0.0
    %v2208 = vsel %vm2200, %v2188, 0.0
    %v2209 = vadd.f32 %v2185, %v2201
    %v2210 = vadd.f32 %v2186, %v2202
    %v2211 = vadd.f32 %v2187, %v2203
    %v2212 = vadd.f32 %v2188, %v2204
    %v2213 = vadd.f32 %v2189, %v2205
    %v2214 = vadd.f32 %v2190, %v2206
    %v2215 = vadd.f32 %v2191, %v2207
    %v2216 = vadd.f32 %v2192, %v2208
    %vm2217 = vcmp.eq.s32.totalorder %v1794, 0
    %vm2218 = vcmp.eq.s32.totalorder %v1795, 0
    %vm2219 = vcmp.eq.s32.totalorder %v1796, 0
    %vm2220 = vcmp.eq.s32.totalorder %v1797, 0
    %vm2221 = vcmp.eq.s32.totalorder %v1798, 0
    %vm2222 = vcmp.eq.s32.totalorder %v1799, 0
    %vm2223 = vcmp.eq.s32.totalorder %v1800, 0
    %vm2224 = vcmp.eq.s32.totalorder %v1801, 0
    %2225 = vrot.lane.b32.xlu0 %v2209, 1
    %v2226 = vpop.permute.xlu0 %2225
    %2227 = vrot.lane.b32.xlu0 %v2210, 1
    %v2228 = vpop.permute.xlu0 %2227
    %2229 = vrot.lane.b32.xlu0 %v2211, 1
    %v2230 = vpop.permute.xlu0 %2229
    %2231 = vrot.lane.b32.xlu0 %v2212, 1
    %v2232 = vpop.permute.xlu0 %2231
    %2233 = vrot.lane.b32.xlu0 %v2213, 1
    %v2234 = vpop.permute.xlu0 %2233
    %2235 = vrot.lane.b32.xlu0 %v2214, 1
    %v2236 = vpop.permute.xlu0 %2235
    %2237 = vrot.lane.b32.xlu0 %v2215, 1
    %v2238 = vpop.permute.xlu0 %2237
    %2239 = vrot.lane.b32.xlu0 %v2216, 1
    %v2240 = vpop.permute.xlu0 %2239
    %v2241 = vsel %vm1818, %v2238, %v2240
    %v2242 = vsel %vm1818, %v2236, %v2238
    %v2243 = vsel %vm1818, %v2234, %v2236
    %v2244 = vsel %vm1818, %v2232, %v2234
    %v2245 = vsel %vm1818, %v2230, %v2232
    %v2246 = vsel %vm1818, %v2228, %v2230
    %v2247 = vsel %vm1818, %v2226, %v2228
    %v2248 = vsel %vm1818, %v2240, %v2226
    %v2249 = vsel %vm2217, 0.0, %v2248
    %v2250 = vsel %vm2218, 0.0, %v2247
    %v2251 = vsel %vm2219, 0.0, %v2246
    %v2252 = vsel %vm2220, 0.0, %v2245
    %v2253 = vsel %vm2221, 0.0, %v2244
    %v2254 = vsel %vm2222, 0.0, %v2243
    %v2255 = vsel %vm2223, 0.0, %v2242
    %v2256 = vsel %vm2224, 0.0, %v2241
    %v2257 = vadd.f32 %v1046, %v1768
    %v2258 = vadd.f32 %v1149, %v1768
    %v2259 = vadd.f32 %v1252, %v1768
    %v2260 = vadd.f32 %v1355, %v1768
    %v2261 = vadd.f32 %v1458, %v1768
    %v2262 = vadd.f32 %v1561, %v1768
    %v2263 = vadd.f32 %v1664, %v1768
    %v2264 = vadd.f32 %v1767, %v1768
    %v2265 = vmul.f32 %v2249, 1.442695
    %v2266 = vpow.pop %v2265
    %v2267 = vmul.f32 %v2250, 1.442695
    %v2268 = vpow.pop %v2267
    %v2269 = vmul.f32 %v2251, 1.442695
    %v2270 = vpow.pop %v2269
    %v2271 = vmul.f32 %v2252, 1.442695
    %v2272 = vpow.pop %v2271
    %v2273 = vmul.f32 %v2253, 1.442695
    %v2274 = vpow.pop %v2273
    %v2275 = vmul.f32 %v2254, 1.442695
    %v2276 = vpow.pop %v2275
    %v2277 = vmul.f32 %v2255, 1.442695
    %v2278 = vpow.pop %v2277
    %v2279 = vmul.f32 %v2256, 1.442695
    %v2280 = vpow.pop %v2279
    %v2281 = vstv %s25
    %v2282 = vmul.f32 %v2281, %v2266
    %v2283 = vmul.f32 %v2281, %v2268
    %v2284 = vmul.f32 %v2281, %v2270
    %v2285 = vmul.f32 %v2281, %v2272
    %v2286 = vmul.f32 %v2281, %v2274
    %v2287 = vmul.f32 %v2281, %v2276
    %v2288 = vmul.f32 %v2281, %v2278
    %v2289 = vmul.f32 %v2281, %v2280
    %v2290 = vmul.f32 %v2282, %v2257
    %v2291 = vmul.f32 %v2283, %v2258
    %v2292 = vmul.f32 %v2284, %v2259
    %v2293 = vmul.f32 %v2285, %v2260
    %v2294 = vmul.f32 %v2286, %v2261
    %v2295 = vmul.f32 %v2287, %v2262
    %v2296 = vmul.f32 %v2288, %v2263
    %v2297 = vmul.f32 %v2289, %v2264
    %2298 = vst [vmem:[%s2] sm:$0xff] %v2290
    %2299 = vst [vmem:[%s2 + $0x8] sm:$0xff] %v2291
    %2300 = vst [vmem:[%s2 + $0x10] sm:$0xff] %v2292
    %2301 = vst [vmem:[%s2 + $0x18] sm:$0xff] %v2293
    %2302 = vst [vmem:[%s2 + $0x20] sm:$0xff] %v2294
    %2303 = vst [vmem:[%s2 + $0x28] sm:$0xff] %v2295
    %2304 = vst [vmem:[%s2 + $0x30] sm:$0xff] %v2296
    %2305 = vst [vmem:[%s2 + $0x38] sm:$0xff] %v2297
    %v2306 = vmul.f32 %v2216, 1.442695
    %v2307 = vpow.pop %v2306
    %v2308 = vmul.f32 %v2281, %v2307
    %2310 = vset.pattern.permute.xlu0 127
    %2311 = vperm.xlu0 %2310, %v2308
    %v2312 = vpop.permute.xlu0 %2311
    %2314 = vst [vmem:[%s2 + $0x40] sm:$0xff] %v2312
    // Predicated region
    $region14: #{spherization.1} parent=1 // pred_check
      _
    $region15: #{spherization.1} parent=1 // pred_check_branch
      %2316 = sbr.rel (0) target = $region17
    $region16: #{spherization.1} parent=1 // pred_region
      _
    $region17: #{spherization.1} parent=1 // pred_fallthru
      _
    // Predicated region
    $region18: #{spherization.1} parent=1 // pred_check
      _
    $region19: #{spherization.1} parent=1 // pred_check_branch
      %2318 = sbr.rel (0) target = $region21
    $region20: #{spherization.1} parent=1 // pred_region
      _
    $region21: #{spherization.1} parent=1 // pred_fallthru
      _
    %2319 = vsyncpa [#allocation3], 1

</llo_original>
